<compile_context>
chip_gen: v7x
topology: tpu7x:2x2x1
jax: 0.10.0
libtpu: 0.0.40
codegen_flags: <defaults>
</compile_context>

<pallas_src>
import functools
import math

import jax
import jax.numpy as jnp
from jax import lax
from jax.experimental import pallas as pl
from jax.experimental.pallas import tpu as pltpu


def _round_up(x, m):
    return (x + m - 1) // m * m


def _conv_stats_kernel(x_ref, w_ref, conv_ref, stats_ref, *scratch,
                       TH, W, Cin, Cout_pad, KH, KW, dil, fuse_taps):
    """Dilated conv for one (batch, row-tile) + partial BN statistics.

    x_ref:     (Hp, Wp, Cin)          padded input image (bf16), resident per batch elem
    w_ref:     (KH*KW, Cin, Cout_pad) conv taps (bf16)
    conv_ref:  (TH, W, Cout_pad)      f32 conv output row-tile
    stats_ref: (8, Cout_pad)          row0 = sum, row1 = sum of squares (f32)
    scratch:   optionally (TH*W, KH*KW*Cin) bf16 im2col buffer (fused path)
    """
    t = pl.program_id(1)
    r0 = pl.multiple_of(t * TH, TH)

    if fuse_taps:
        # Build the im2col slab once (one VMEM copy per tap, no accumulate adds),
        # then a single MXU dot with K = KH*KW*Cin does all the accumulation.
        im2col_ref, = scratch
        for kh in range(KH):
            for kw in range(KW):
                tap = kh * KW + kw
                patch = x_ref[pl.ds(r0 + kh * dil, TH), pl.ds(kw * dil, W), :]
                im2col_ref[:, tap * Cin:(tap + 1) * Cin] = patch.reshape(TH * W, Cin)
        rhs = w_ref[...].reshape(KH * KW * Cin, Cout_pad)
        acc = jnp.dot(im2col_ref[...], rhs, preferred_element_type=jnp.float32)
    else:
        # Large Cin: each tap already saturates the MXU contraction depth.
        acc = jnp.zeros((TH * W, Cout_pad), dtype=jnp.float32)
        for kh in range(KH):
            for kw in range(KW):
                patch = x_ref[pl.ds(r0 + kh * dil, TH), pl.ds(kw * dil, W), :]
                acc = acc + jnp.dot(patch.reshape(TH * W, Cin), w_ref[kh * KW + kw],
                                    preferred_element_type=jnp.float32)

    conv_ref[...] = acc.reshape(TH, W, Cout_pad)

    # Per-tile partial BatchNorm statistics (reduced across the grid in the wrapper).
    s1 = jnp.sum(acc, axis=0, keepdims=True)          # (1, Cout_pad)
    s2 = jnp.sum(acc * acc, axis=0, keepdims=True)    # (1, Cout_pad)
    row = lax.broadcasted_iota(jnp.int32, (8, Cout_pad), 0)
    stats_ref[...] = jnp.where(row == 0, s1, jnp.where(row == 1, s2, 0.0))


def _bn_relu_kernel(conv_ref, a_ref, b_ref, o_ref):
    """y = max(conv * a + b, 0) with per-channel a, b (folded BN)."""
    a = a_ref[...].reshape(1, 1, -1)
    b = b_ref[...].reshape(1, 1, -1)
    o_ref[...] = jnp.maximum(conv_ref[...] * a + b, 0.0)


def aspp_module_forward(x_nchw, weight_oihw, gamma, beta, *,
                        dilation, padding, eps=1e-5,
                        tile_h=None, compute_dtype=jnp.bfloat16):
    """Pallas implementation of _ASPPModule.forward (train-mode BatchNorm semantics).

    x_nchw:      (N, Cin, H, W)       float32
    weight_oihw: (Cout, Cin, KH, KW)  float32 (PyTorch conv layout, bias=False)
    gamma, beta: (Cout,)              BatchNorm affine params
    Returns:     (N, Cout, H, W)      float32
    """
    N, Cin, H, W = x_nchw.shape
    Cout, _, KH, KW = weight_oihw.shape
    # ASPP branches are 'same'-size atrous convs (stride 1, padding == dilation for k=3).
    assert 2 * padding == dilation * (KH - 1) and 2 * padding == dilation * (KW - 1), \
        "kernel assumes same-size atrous conv (2*padding == dilation*(k-1))"

    Cout_pad = _round_up(Cout, 128)        # lane-dense output stores
    Hp, Wp = H + 2 * padding, W + 2 * padding

    # Pick the largest row tile whose f32 conv-out block stays within a modest VMEM budget
    # (keeps headroom for double buffering; safe on v7x's 64 MiB VMEM as well).
    if tile_h is None:
        budget = 512 * 1024
        rows = max(1, budget // (W * Cout_pad * 4))
        tile_h = 1
        for d in range(1, H + 1):
            if H % d == 0 and d <= rows:
                tile_h = d
    assert H % tile_h == 0
    T = H // tile_h

    # NCHW -> NHWC, spatial zero-pad, bf16 matmul operands (f32 accumulation in-kernel).
    x_nhwc = jnp.transpose(x_nchw, (0, 2, 3, 1))
    x_pad = jnp.pad(x_nhwc, ((0, 0), (padding, padding), (padding, padding), (0, 0)))
    x_pad = x_pad.astype(compute_dtype)

    # (Cout, Cin, KH, KW) -> (KH*KW, Cin, Cout_pad), zero-padded output channels.
    w = jnp.transpose(weight_oihw, (2, 3, 1, 0)).reshape(KH * KW, Cin, Cout)
    w = jnp.pad(w, ((0, 0), (0, 0), (0, Cout_pad - Cout))).astype(compute_dtype)

    fuse_taps = (KH * KW * Cin) <= 512

    kernel1 = functools.partial(
        _conv_stats_kernel, TH=tile_h, W=W, Cin=Cin, Cout_pad=Cout_pad,
        KH=KH, KW=KW, dil=dilation, fuse_taps=fuse_taps)

    flops1 = 2 * N * H * W * KH * KW * Cin * Cout_pad
    bytes1 = (x_pad.size * x_pad.dtype.itemsize + w.size * w.dtype.itemsize
              + N * H * W * Cout_pad * 4 + N * T * 8 * Cout_pad * 4)

    conv_out, stats = pl.pallas_call(
        kernel1,
        grid=(N, T),
        in_specs=(
            pl.BlockSpec((None, Hp, Wp, Cin), lambda n, t: (n, 0, 0, 0)),
            pl.BlockSpec((KH * KW, Cin, Cout_pad), lambda n, t: (0, 0, 0)),
        ),
        out_specs=(
            pl.BlockSpec((None, tile_h, W, Cout_pad), lambda n, t: (n, t, 0, 0)),
            pl.BlockSpec((None, None, 8, Cout_pad), lambda n, t: (n, t, 0, 0)),
        ),
        out_shape=(
            jax.ShapeDtypeStruct((N, H, W, Cout_pad), jnp.float32),
            jax.ShapeDtypeStruct((N, T, 8, Cout_pad), jnp.float32),
        ),
        scratch_shapes=((pltpu.VMEM((tile_h * W, KH * KW * Cin), compute_dtype),)
                        if fuse_taps else ()),
        compiler_params=pltpu.CompilerParams(
            dimension_semantics=("parallel", "parallel")),
        cost_estimate=pl.CostEstimate(
            flops=flops1, transcendentals=0, bytes_accessed=bytes1),
    )(x_pad, w)

    # Fold BatchNorm (training-mode batch statistics, biased variance) into per-channel
    # scale/offset: y = conv * a + b.  This is a tiny per-channel computation.
    count = float(N * H * W)
    s = jnp.sum(stats, axis=(0, 1))                              # (8, Cout_pad)
    mean = s[0] / count
    var = jnp.maximum(s[1] / count - mean * mean, 0.0)
    gamma_pad = jnp.pad(gamma.astype(jnp.float32), (0, Cout_pad - Cout))
    beta_pad = jnp.pad(beta.astype(jnp.float32), (0, Cout_pad - Cout))
    a = (gamma_pad * lax.rsqrt(var + eps)).reshape(1, Cout_pad)
    b = (beta_pad - mean * a[0]).reshape(1, Cout_pad)

    flops2 = 2 * N * H * W * Cout_pad
    bytes2 = 2 * N * H * W * Cout_pad * 4 + 2 * Cout_pad * 4
    out_pad = pl.pallas_call(
        _bn_relu_kernel,
        grid=(N, T),
        in_specs=(
            pl.BlockSpec((None, tile_h, W, Cout_pad), lambda n, t: (n, t, 0, 0)),
            pl.BlockSpec((1, Cout_pad), lambda n, t: (0, 0)),
            pl.BlockSpec((1, Cout_pad), lambda n, t: (0, 0)),
        ),
        out_specs=pl.BlockSpec((None, tile_h, W, Cout_pad), lambda n, t: (n, t, 0, 0)),
        out_shape=jax.ShapeDtypeStruct((N, H, W, Cout_pad), jnp.float32),
        compiler_params=pltpu.CompilerParams(
            dimension_semantics=("parallel", "parallel")),
        cost_estimate=pl.CostEstimate(
            flops=flops2, transcendentals=0, bytes_accessed=bytes2),
    )(conv_out, a, b)

    # NHWC -> NCHW, drop channel padding.
    return jnp.transpose(out_pad[..., :Cout], (0, 3, 1, 2))


def _reference_forward(x_nchw, weight_oihw, gamma, beta, *, dilation, padding,
                       eps=1e-5, compute_dtype=jnp.bfloat16):
    """Pure-JAX reference (same bf16-operand / f32-accumulate conv, train-mode BN, ReLU)."""
    conv = lax.conv_general_dilated(
        x_nchw.astype(compute_dtype), weight_oihw.astype(compute_dtype),
        window_strides=(1, 1),
        padding=((padding, padding), (padding, padding)),
        rhs_dilation=(dilation, dilation),
        dimension_numbers=("NCHW", "OIHW", "NCHW"),
        preferred_element_type=jnp.float32)
    mean = jnp.mean(conv, axis=(0, 2, 3), keepdims=True)
    var = jnp.mean((conv - mean) ** 2, axis=(0, 2, 3), keepdims=True)
    y = (conv - mean) * lax.rsqrt(var + eps)
    y = y * gamma.reshape(1, -1, 1, 1) + beta.reshape(1, -1, 1, 1)
    return jnp.maximum(y, 0.0)


if __name__ == "__main__":
    # Small shapes consistent with the module: ASPP branch, kernel_size=3,
    # padding == dilation (same spatial output size).
    N, Cin, H, W = 2, 4, 16, 16
    Cout = 8
    KH = KW = 3
    dilation = 2
    padding = 2

    key = jax.random.PRNGKey(0)
    k_x, k_w = jax.random.split(key)

    x = jax.random.normal(k_x, (N, Cin, H, W), dtype=jnp.float32)

    # Deterministic kaiming_normal_ (fan_in, gain=sqrt(2)) for the conv weight.
    fan_in = Cin * KH * KW
    std = math.sqrt(2.0 / fan_in)
    weight = std * jax.random.normal(k_w, (Cout, Cin, KH, KW), dtype=jnp.float32)

    # BatchNorm affine params per _init_weight: weight=1, bias=0.
    gamma = jnp.ones((Cout,), dtype=jnp.float32)
    beta = jnp.zeros((Cout,), dtype=jnp.float32)

    fwd = jax.jit(functools.partial(
        aspp_module_forward, dilation=dilation, padding=padding, tile_h=8))
    out = fwd(x, weight, gamma, beta)
    out = jax.block_until_ready(out)

    ref = _reference_forward(x, weight, gamma, beta, dilation=dilation, padding=padding)
    assert out.shape == (N, Cout, H, W)
    max_diff = float(jnp.max(jnp.abs(out - ref)))
    assert jnp.allclose(out, ref, atol=2e-3, rtol=2e-3), (
        f"mismatch vs reference, max abs diff {max_diff}")

    print("KERNEL_OK")
</pallas_src>

<mosaic_0001>
module attributes {stable_mosaic.version = 11 : i64} {
  func.func @_conv_stats_kernel(%arg0: i32, %arg1: i32, %arg2: memref<1x20x20x4xbf16, #tpu.memory_space<vmem>>, %arg3: memref<9x4x128xbf16, #tpu.memory_space<vmem>>, %arg4: memref<1x8x16x128xf32, #tpu.memory_space<vmem>>, %arg5: memref<1x1x8x128xf32, #tpu.memory_space<vmem>>, %arg6: memref<128x36xbf16, #tpu.memory_space<vmem>>) attributes {dimension_semantics = [#tpu.dimension_semantics<parallel>, #tpu.dimension_semantics<parallel>], iteration_bounds = array<i64: 2, 2>, scalar_prefetch = 0 : i64, scratch_operands = 1 : i64, tpu.core_type = #tpu.core_type<tc>, window_params = [{transform_indices = @transform_0, window_bounds = array<i64: 1, 20, 20, 4>}, {pipeline_mode = #tpu.pipeline_mode<synchronous>, transform_indices = @transform_1, window_bounds = array<i64: 9, 4, 128>}, {transform_indices = @transform_2, window_bounds = array<i64: 1, 8, 16, 128>}, {transform_indices = @transform_3, window_bounds = array<i64: 1, 1, 8, 128>}]} {
    %c8_i32 = arith.constant 8 : i32
    %0 = arith.muli %arg1, %c8_i32 : i32
    %1 = tpu.assume_multiple %0, 8 : i32
    %c0_i32 = arith.constant 0 : i32
    %2 = arith.addi %1, %c0_i32 : i32
    %c0 = arith.constant 0 : index
    %3 = arith.index_cast %2 : i32 to index
    %c0_0 = arith.constant 0 : index
    %c0_1 = arith.constant 0 : index
    %4 = vector.load %arg2[%c0, %3, %c0_0, %c0_1] : memref<1x20x20x4xbf16, #tpu.memory_space<vmem>>, vector<1x8x16x4xbf16>
    %5 = vector.shape_cast %4 : vector<1x8x16x4xbf16> to vector<8x16x4xbf16>
    %6 = vector.shape_cast %5 : vector<8x16x4xbf16> to vector<128x4xbf16>
    %c0_2 = arith.constant 0 : index
    %c0_3 = arith.constant 0 : index
    %7 = vector.load %arg6[%c0_2, %c0_3] : memref<128x36xbf16, #tpu.memory_space<vmem>>, vector<128x4xbf16>
    tpu.vector_store %arg6[%c0_2, %c0_3], %6 {strides = array<i32>} : memref<128x36xbf16, #tpu.memory_space<vmem>>, vector<128x4xbf16>,
    %c0_i32_4 = arith.constant 0 : i32
    %8 = arith.addi %1, %c0_i32_4 : i32
    %c0_5 = arith.constant 0 : index
    %9 = arith.index_cast %8 : i32 to index
    %c2 = arith.constant 2 : index
    %c0_6 = arith.constant 0 : index
    %10 = vector.load %arg2[%c0_5, %9, %c2, %c0_6] : memref<1x20x20x4xbf16, #tpu.memory_space<vmem>>, vector<1x8x16x4xbf16>
    %11 = vector.shape_cast %10 : vector<1x8x16x4xbf16> to vector<8x16x4xbf16>
    %12 = vector.shape_cast %11 : vector<8x16x4xbf16> to vector<128x4xbf16>
    %c0_7 = arith.constant 0 : index
    %c4 = arith.constant 4 : index
    %13 = vector.load %arg6[%c0_7, %c4] : memref<128x36xbf16, #tpu.memory_space<vmem>>, vector<128x4xbf16>
    tpu.vector_store %arg6[%c0_7, %c4], %12 {strides = array<i32>} : memref<128x36xbf16, #tpu.memory_space<vmem>>, vector<128x4xbf16>,
    %c0_i32_8 = arith.constant 0 : i32
    %14 = arith.addi %1, %c0_i32_8 : i32
    %c0_9 = arith.constant 0 : index
    %15 = arith.index_cast %14 : i32 to index
    %c4_10 = arith.constant 4 : index
    %c0_11 = arith.constant 0 : index
    %16 = vector.load %arg2[%c0_9, %15, %c4_10, %c0_11] : memref<1x20x20x4xbf16, #tpu.memory_space<vmem>>, vector<1x8x16x4xbf16>
    %17 = vector.shape_cast %16 : vector<1x8x16x4xbf16> to vector<8x16x4xbf16>
    %18 = vector.shape_cast %17 : vector<8x16x4xbf16> to vector<128x4xbf16>
    %c0_12 = arith.constant 0 : index
    %c8 = arith.constant 8 : index
    %19 = vector.load %arg6[%c0_12, %c8] : memref<128x36xbf16, #tpu.memory_space<vmem>>, vector<128x4xbf16>
    tpu.vector_store %arg6[%c0_12, %c8], %18 {strides = array<i32>} : memref<128x36xbf16, #tpu.memory_space<vmem>>, vector<128x4xbf16>,
    %c2_i32 = arith.constant 2 : i32
    %20 = arith.addi %1, %c2_i32 : i32
    %c0_13 = arith.constant 0 : index
    %21 = arith.index_cast %20 : i32 to index
    %c0_14 = arith.constant 0 : index
    %c0_15 = arith.constant 0 : index
    %22 = vector.load %arg2[%c0_13, %21, %c0_14, %c0_15] : memref<1x20x20x4xbf16, #tpu.memory_space<vmem>>, vector<1x8x16x4xbf16>
    %23 = vector.shape_cast %22 : vector<1x8x16x4xbf16> to vector<8x16x4xbf16>
    %24 = vector.shape_cast %23 : vector<8x16x4xbf16> to vector<128x4xbf16>
    %c0_16 = arith.constant 0 : index
    %c12 = arith.constant 12 : index
    %25 = vector.load %arg6[%c0_16, %c12] : memref<128x36xbf16, #tpu.memory_space<vmem>>, vector<128x4xbf16>
    tpu.vector_store %arg6[%c0_16, %c12], %24 {strides = array<i32>} : memref<128x36xbf16, #tpu.memory_space<vmem>>, vector<128x4xbf16>,
    %c2_i32_17 = arith.constant 2 : i32
    %26 = arith.addi %1, %c2_i32_17 : i32
    %c0_18 = arith.constant 0 : index
    %27 = arith.index_cast %26 : i32 to index
    %c2_19 = arith.constant 2 : index
    %c0_20 = arith.constant 0 : index
    %28 = vector.load %arg2[%c0_18, %27, %c2_19, %c0_20] : memref<1x20x20x4xbf16, #tpu.memory_space<vmem>>, vector<1x8x16x4xbf16>
    %29 = vector.shape_cast %28 : vector<1x8x16x4xbf16> to vector<8x16x4xbf16>
    %30 = vector.shape_cast %29 : vector<8x16x4xbf16> to vector<128x4xbf16>
    %c0_21 = arith.constant 0 : index
    %c16 = arith.constant 16 : index
    %31 = vector.load %arg6[%c0_21, %c16] : memref<128x36xbf16, #tpu.memory_space<vmem>>, vector<128x4xbf16>
    tpu.vector_store %arg6[%c0_21, %c16], %30 {strides = array<i32>} : memref<128x36xbf16, #tpu.memory_space<vmem>>, vector<128x4xbf16>,
    %c2_i32_22 = arith.constant 2 : i32
    %32 = arith.addi %1, %c2_i32_22 : i32
    %c0_23 = arith.constant 0 : index
    %33 = arith.index_cast %32 : i32 to index
    %c4_24 = arith.constant 4 : index
    %c0_25 = arith.constant 0 : index
    %34 = vector.load %arg2[%c0_23, %33, %c4_24, %c0_25] : memref<1x20x20x4xbf16, #tpu.memory_space<vmem>>, vector<1x8x16x4xbf16>
    %35 = vector.shape_cast %34 : vector<1x8x16x4xbf16> to vector<8x16x4xbf16>
    %36 = vector.shape_cast %35 : vector<8x16x4xbf16> to vector<128x4xbf16>
    %c0_26 = arith.constant 0 : index
    %c20 = arith.constant 20 : index
    %37 = vector.load %arg6[%c0_26, %c20] : memref<128x36xbf16, #tpu.memory_space<vmem>>, vector<128x4xbf16>
    tpu.vector_store %arg6[%c0_26, %c20], %36 {strides = array<i32>} : memref<128x36xbf16, #tpu.memory_space<vmem>>, vector<128x4xbf16>,
    %c4_i32 = arith.constant 4 : i32
    %38 = arith.addi %1, %c4_i32 : i32
    %c0_27 = arith.constant 0 : index
    %39 = arith.index_cast %38 : i32 to index
    %c0_28 = arith.constant 0 : index
    %c0_29 = arith.constant 0 : index
    %40 = vector.load %arg2[%c0_27, %39, %c0_28, %c0_29] : memref<1x20x20x4xbf16, #tpu.memory_space<vmem>>, vector<1x8x16x4xbf16>
    %41 = vector.shape_cast %40 : vector<1x8x16x4xbf16> to vector<8x16x4xbf16>
    %42 = vector.shape_cast %41 : vector<8x16x4xbf16> to vector<128x4xbf16>
    %c0_30 = arith.constant 0 : index
    %c24 = arith.constant 24 : index
    %43 = vector.load %arg6[%c0_30, %c24] : memref<128x36xbf16, #tpu.memory_space<vmem>>, vector<128x4xbf16>
    tpu.vector_store %arg6[%c0_30, %c24], %42 {strides = array<i32>} : memref<128x36xbf16, #tpu.memory_space<vmem>>, vector<128x4xbf16>,
    %c4_i32_31 = arith.constant 4 : i32
    %44 = arith.addi %1, %c4_i32_31 : i32
    %c0_32 = arith.constant 0 : index
    %45 = arith.index_cast %44 : i32 to index
    %c2_33 = arith.constant 2 : index
    %c0_34 = arith.constant 0 : index
    %46 = vector.load %arg2[%c0_32, %45, %c2_33, %c0_34] : memref<1x20x20x4xbf16, #tpu.memory_space<vmem>>, vector<1x8x16x4xbf16>
    %47 = vector.shape_cast %46 : vector<1x8x16x4xbf16> to vector<8x16x4xbf16>
    %48 = vector.shape_cast %47 : vector<8x16x4xbf16> to vector<128x4xbf16>
    %c0_35 = arith.constant 0 : index
    %c28 = arith.constant 28 : index
    %49 = vector.load %arg6[%c0_35, %c28] : memref<128x36xbf16, #tpu.memory_space<vmem>>, vector<128x4xbf16>
    tpu.vector_store %arg6[%c0_35, %c28], %48 {strides = array<i32>} : memref<128x36xbf16, #tpu.memory_space<vmem>>, vector<128x4xbf16>,
    %c4_i32_36 = arith.constant 4 : i32
    %50 = arith.addi %1, %c4_i32_36 : i32
    %c0_37 = arith.constant 0 : index
    %51 = arith.index_cast %50 : i32 to index
    %c4_38 = arith.constant 4 : index
    %c0_39 = arith.constant 0 : index
    %52 = vector.load %arg2[%c0_37, %51, %c4_38, %c0_39] : memref<1x20x20x4xbf16, #tpu.memory_space<vmem>>, vector<1x8x16x4xbf16>
    %53 = vector.shape_cast %52 : vector<1x8x16x4xbf16> to vector<8x16x4xbf16>
    %54 = vector.shape_cast %53 : vector<8x16x4xbf16> to vector<128x4xbf16>
    %c0_40 = arith.constant 0 : index
    %c32 = arith.constant 32 : index
    %55 = vector.load %arg6[%c0_40, %c32] : memref<128x36xbf16, #tpu.memory_space<vmem>>, vector<128x4xbf16>
    tpu.vector_store %arg6[%c0_40, %c32], %54 {strides = array<i32>} : memref<128x36xbf16, #tpu.memory_space<vmem>>, vector<128x4xbf16>,
    %c0_41 = arith.constant 0 : index
    %c0_42 = arith.constant 0 : index
    %c0_43 = arith.constant 0 : index
    %56 = vector.load %arg3[%c0_41, %c0_42, %c0_43] : memref<9x4x128xbf16, #tpu.memory_space<vmem>>, vector<9x4x128xbf16>
    %57 = vector.shape_cast %56 : vector<9x4x128xbf16> to vector<36x128xbf16>
    %c0_44 = arith.constant 0 : index
    %c0_45 = arith.constant 0 : index
    %58 = vector.load %arg6[%c0_44, %c0_45] : memref<128x36xbf16, #tpu.memory_space<vmem>>, vector<128x36xbf16>
    %cst = arith.constant dense<0.000000e+00> : vector<128x128xf32>
    %59 = tpu.matmul %58, %57, %cst {dimension_numbers = #tpu.dot_dimension_numbers<[1], [0], [0], [1], [0, 0, 1, 1], [], []>} : vector<128x36xbf16>, vector<36x128xbf16>, vector<128x128xf32> -> vector<128x128xf32>
    %60 = vector.shape_cast %59 : vector<128x128xf32> to vector<8x16x128xf32>
    %c0_46 = arith.constant 0 : index
    %c0_47 = arith.constant 0 : index
    %c0_48 = arith.constant 0 : index
    %c0_49 = arith.constant 0 : index
    %61 = vector.load %arg4[%c0_46, %c0_47, %c0_48, %c0_49] : memref<1x8x16x128xf32, #tpu.memory_space<vmem>>, vector<1x8x16x128xf32>
    %62 = vector.shape_cast %61 : vector<1x8x16x128xf32> to vector<8x16x128xf32>
    %63 = vector.shape_cast %60 : vector<8x16x128xf32> to vector<1x8x16x128xf32>
    tpu.vector_store %arg4[%c0_46, %c0_47, %c0_48, %c0_49], %63 {strides = array<i32>} : memref<1x8x16x128xf32, #tpu.memory_space<vmem>>, vector<1x8x16x128xf32>,
    %cst_50 = arith.constant dense<0.000000e+00> : vector<128xf32>
    %64 = vector.multi_reduction <add>, %59, %cst_50 [0] : vector<128x128xf32> to vector<128xf32>
    %65 = vector.shape_cast %64 : vector<128xf32> to vector<1x128xf32>
    %66 = arith.mulf %59, %59 : vector<128x128xf32>
    %cst_51 = arith.constant dense<0.000000e+00> : vector<128xf32>
    %67 = vector.multi_reduction <add>, %66, %cst_51 [0] : vector<128x128xf32> to vector<128xf32>
    %68 = vector.shape_cast %67 : vector<128xf32> to vector<1x128xf32>
    %69 = tpu.iota {dimensions = array<i32: 0>} : vector<8x128xi32>
    %c0_i32_52 = arith.constant 0 : i32
    %70 = vector.broadcast %c0_i32_52 : i32 to vector<8x128xi32>
    %71 = arith.cmpi eq, %69, %70 : vector<8x128xi32>
    %c1_i32 = arith.constant 1 : i32
    %72 = vector.broadcast %c1_i32 : i32 to vector<8x128xi32>
    %73 = arith.cmpi eq, %69, %72 : vector<8x128xi32>
    %cst_53 = arith.constant 0.000000e+00 : f32
    %74 = vector.shape_cast %68 : vector<1x128xf32> to vector<1x128xf32>
    %75 = vector.broadcast %74 : vector<1x128xf32> to vector<8x128xf32>
    %76 = vector.broadcast %cst_53 : f32 to vector<8x128xf32>
    %77 = arith.select %73, %75, %76 : vector<8x128xi1>, vector<8x128xf32>
    %78 = vector.shape_cast %65 : vector<1x128xf32> to vector<1x128xf32>
    %79 = vector.broadcast %78 : vector<1x128xf32> to vector<8x128xf32>
    %80 = arith.select %71, %79, %77 : vector<8x128xi1>, vector<8x128xf32>
    %c0_54 = arith.constant 0 : index
    %c0_55 = arith.constant 0 : index
    %c0_56 = arith.constant 0 : index
    %c0_57 = arith.constant 0 : index
    %81 = vector.load %arg5[%c0_54, %c0_55, %c0_56, %c0_57] : memref<1x1x8x128xf32, #tpu.memory_space<vmem>>, vector<1x1x8x128xf32>
    %82 = vector.shape_cast %81 : vector<1x1x8x128xf32> to vector<8x128xf32>
    %83 = vector.shape_cast %80 : vector<8x128xf32> to vector<1x1x8x128xf32>
    tpu.vector_store %arg5[%c0_54, %c0_55, %c0_56, %c0_57], %83 {strides = array<i32>} : memref<1x1x8x128xf32, #tpu.memory_space<vmem>>, vector<1x1x8x128xf32>,
    return
  }
  func.func @transform_0(%arg0: i32, %arg1: i32) -> (i32, i32, i32, i32) {
    %c0_i32 = arith.constant 0 : i32
    %c0_i32_0 = arith.constant 0 : i32
    %c0_i32_1 = arith.constant 0 : i32
    %c0_i32_2 = arith.constant 0 : i32
    return %arg0, %c0_i32, %c0_i32_0, %c0_i32_1 : i32, i32, i32, i32
  }
  func.func @transform_1(%arg0: i32, %arg1: i32) -> (i32, i32, i32) {
    %c0_i32 = arith.constant 0 : i32
    %c0_i32_0 = arith.constant 0 : i32
    %c0_i32_1 = arith.constant 0 : i32
    %c0_i32_2 = arith.constant 0 : i32
    return %c0_i32, %c0_i32_0, %c0_i32_1 : i32, i32, i32
  }
  func.func @transform_2(%arg0: i32, %arg1: i32) -> (i32, i32, i32, i32) {
    %c0_i32 = arith.constant 0 : i32
    %c0_i32_0 = arith.constant 0 : i32
    %c0_i32_1 = arith.constant 0 : i32
    return %arg0, %arg1, %c0_i32, %c0_i32_0 : i32, i32, i32, i32
  }
  func.func @transform_3(%arg0: i32, %arg1: i32) -> (i32, i32, i32, i32) {
    %c0_i32 = arith.constant 0 : i32
    %c0_i32_0 = arith.constant 0 : i32
    %c0_i32_1 = arith.constant 0 : i32
    return %arg0, %arg1, %c0_i32, %c0_i32_0 : i32, i32, i32, i32
  }
}

module attributes {stable_mosaic.version = 11 : i64} {
  func.func @_bn_relu_kernel(%arg0: i32, %arg1: i32, %arg2: memref<1x8x16x128xf32, #tpu.memory_space<vmem>>, %arg3: memref<1x128xf32, #tpu.memory_space<vmem>>, %arg4: memref<1x128xf32, #tpu.memory_space<vmem>>, %arg5: memref<1x8x16x128xf32, #tpu.memory_space<vmem>>) attributes {dimension_semantics = [#tpu.dimension_semantics<parallel>, #tpu.dimension_semantics<parallel>], iteration_bounds = array<i64: 2, 2>, scalar_prefetch = 0 : i64, scratch_operands = 0 : i64, tpu.core_type = #tpu.core_type<tc>, window_params = [{transform_indices = @transform_0, window_bounds = array<i64: 1, 8, 16, 128>}, {pipeline_mode = #tpu.pipeline_mode<synchronous>, transform_indices = @transform_1, window_bounds = array<i64: 1, 128>}, {pipeline_mode = #tpu.pipeline_mode<synchronous>, transform_indices = @transform_2, window_bounds = array<i64: 1, 128>}, {transform_indices = @transform_3, window_bounds = array<i64: 1, 8, 16, 128>}]} {
    %c0 = arith.constant 0 : index
    %c0_0 = arith.constant 0 : index
    %0 = vector.load %arg3[%c0, %c0_0] : memref<1x128xf32, #tpu.memory_space<vmem>>, vector<1x128xf32>
    %1 = vector.shape_cast %0 : vector<1x128xf32> to vector<1x1x128xf32>
    %c0_1 = arith.constant 0 : index
    %c0_2 = arith.constant 0 : index
    %2 = vector.load %arg4[%c0_1, %c0_2] : memref<1x128xf32, #tpu.memory_space<vmem>>, vector<1x128xf32>
    %3 = vector.shape_cast %2 : vector<1x128xf32> to vector<1x1x128xf32>
    %c0_3 = arith.constant 0 : index
    %c0_4 = arith.constant 0 : index
    %c0_5 = arith.constant 0 : index
    %c0_6 = arith.constant 0 : index
    %4 = vector.load %arg2[%c0_3, %c0_4, %c0_5, %c0_6] : memref<1x8x16x128xf32, #tpu.memory_space<vmem>>, vector<1x8x16x128xf32>
    %5 = vector.shape_cast %4 : vector<1x8x16x128xf32> to vector<8x16x128xf32>
    %6 = vector.broadcast %1 : vector<1x1x128xf32> to vector<8x16x128xf32>
    %7 = arith.mulf %5, %6 : vector<8x16x128xf32>
    %8 = vector.broadcast %3 : vector<1x1x128xf32> to vector<8x16x128xf32>
    %9 = arith.addf %7, %8 : vector<8x16x128xf32>
    %cst = arith.constant 0.000000e+00 : f32
    %10 = vector.broadcast %cst : f32 to vector<8x16x128xf32>
    %11 = arith.maximumf %9, %10 : vector<8x16x128xf32>
    %c0_7 = arith.constant 0 : index
    %c0_8 = arith.constant 0 : index
    %c0_9 = arith.constant 0 : index
    %c0_10 = arith.constant 0 : index
    %12 = vector.load %arg5[%c0_7, %c0_8, %c0_9, %c0_10] : memref<1x8x16x128xf32, #tpu.memory_space<vmem>>, vector<1x8x16x128xf32>
    %13 = vector.shape_cast %12 : vector<1x8x16x128xf32> to vector<8x16x128xf32>
    %14 = vector.shape_cast %11 : vector<8x16x128xf32> to vector<1x8x16x128xf32>
    tpu.vector_store %arg5[%c0_7, %c0_8, %c0_9, %c0_10], %14 {strides = array<i32>} : memref<1x8x16x128xf32, #tpu.memory_space<vmem>>, vector<1x8x16x128xf32>,
    return
  }
  func.func @transform_0(%arg0: i32, %arg1: i32) -> (i32, i32, i32, i32) {
    %c0_i32 = arith.constant 0 : i32
    %c0_i32_0 = arith.constant 0 : i32
    %c0_i32_1 = arith.constant 0 : i32
    return %arg0, %arg1, %c0_i32, %c0_i32_0 : i32, i32, i32, i32
  }
  func.func @transform_1(%arg0: i32, %arg1: i32) -> (i32, i32) {
    %c0_i32 = arith.constant 0 : i32
    %c0_i32_0 = arith.constant 0 : i32
    %c0_i32_1 = arith.constant 0 : i32
    return %c0_i32, %c0_i32_0 : i32, i32
  }
  func.func @transform_2(%arg0: i32, %arg1: i32) -> (i32, i32) {
    %c0_i32 = arith.constant 0 : i32
    %c0_i32_0 = arith.constant 0 : i32
    %c0_i32_1 = arith.constant 0 : i32
    return %c0_i32, %c0_i32_0 : i32, i32
  }
  func.func @transform_3(%arg0: i32, %arg1: i32) -> (i32, i32, i32, i32) {
    %c0_i32 = arith.constant 0 : i32
    %c0_i32_0 = arith.constant 0 : i32
    %c0_i32_1 = arith.constant 0 : i32
    return %arg0, %arg1, %c0_i32, %c0_i32_0 : i32, i32, i32, i32
  }
}

</mosaic_0001>

<llo_original>
// kernel: aspp_module_forward.3
$region0: #{aspp_module_forward.3}
  #allocation0 [shape = 'u32[]', space=smem, size = 0x4, offset = 0x4, fixed_abs, tag = 'smem constant byte address 0x4 - core index']
  #allocation1 [shape = 'u32[144,128]{1,0:T(1,128)}', space=vmem, size = 0x12000, scoped, tag = 'internal scratch']
  %s0 = inlined_call_operand.vmem [shape: f32[2,16,16,128], index: 0, kind: input, shape index: {}]
  %s1 = inlined_call_operand.vmem [shape: f32[1,128], index: 1, kind: input, shape index: {}]
  %s2 = inlined_call_operand.vmem [shape: f32[1,128], index: 2, kind: input, shape index: {}]
  %s3 = inlined_call_operand.vmem [shape: f32[2,16,16,128], index: 3, kind: output, shape index: {}]
  %s4 = sld [smem:[#allocation0]]
  $region45: #{aspp_module_forward.3} parent=0
    _
  %s6 = ssub.s32 1, %s4
  %s7 = scalar_select 0, %s6, %s4
  loop: start=0, step=1, limit=6
  $region2: #{aspp_module_forward.3} parent=0 // loop_pre_header
    _
  $region3: #{aspp_module_forward.3} parent=0 // loop_header
    %s9 = sphi 0, %s13
    %p10 = scmp.ge.s32.totalorder %s9, 6
    %s16 = sphi 0, %s28
    %s17 = sphi 0, %s24
    %s18 = sphi 0, %s16
    %s19 = sphi 0, %s17
    %s20 = sphi 0, %s18
    %s21 = sphi 0, %s19
    %s33 = sphi 0, %s35
    %s36 = sphi 0, %s33
    %s37 = sphi 0, %s36
    %s53 = sphi 0, %s37
    %s57 = sphi 0, %s57
    %s59 = sphi 0, %s57
    %s60 = sphi 0, %s59
    %s74 = sphi 0, %s60
    %s78 = sphi 0, %s78
    %s80 = sphi 0, %s78
    %s81 = sphi 0, %s80
    %s95 = sphi 0, %s81
    %s103 = sphi 0, %s105
    %s106 = sphi 0, %s103
    %s107 = sphi 0, %s106
    %s123 = sphi 0, %s107
  $region4: #{aspp_module_forward.3} parent=0 // loop_header_branch
    %12 = sbr.rel (%p10) target = $region8
  $region5: #{aspp_module_forward.3} parent=0 // loop_body
    %s14 = ssub.s32 %s9, 1
    %s15 = ssub.s32 %s9, 2
    %s22 = sadd.s32 1, %s17
    %p23 = scmp.ge.s32.totalorder %s22, 2
    %s24 = scalar_select %p23, 0, %s22
    %s25 = sadd.s32 1, %s16
    %s26 = scalar_select %p23, %s25, %s16
    %p27 = scmp.ge.s32.totalorder %s26, 2
    %s28 = scalar_select %p27, 0, %s26
    %s29 = ssub.s32 %s16, %s28
    %s30 = ssub.s32 %s17, %s24
    %s31 = sor.u32 %s29, %s30
    %p32 = scmp.eq.s32.totalorder %s31, 0
    %s34 = sadd.s32 %s33, 1
    %s35 = scalar_select %p32, %s33, %s34
    %p38 = pneg %p32
    %p39 = scmp.eq.s32.totalorder %s9, 3
    %p40 = por %p38, %p39
    %p41 = scmp.ne.s32.totalorder %s33, %s36
    %p42 = scmp.eq.s32.totalorder %s9, 0
    %p43 = por %p41, %p42
    %p44 = scmp.ne.s32.totalorder %s33, %s36
    %p45 = scmp.eq.s32.totalorder %s14, 3
    %p46 = por %p44, %p45
    %p47 = scmp.ne.s32.totalorder %s36, %s37
    %p48 = scmp.eq.s32.totalorder %s14, 0
    %p49 = por %p47, %p48
    %p50 = scmp.ne.s32.totalorder %s36, %s37
    %p51 = scmp.eq.s32.totalorder %s15, 3
    %p52 = por %p50, %p51
    %p54 = scmp.ne.s32.totalorder %s37, %s53
    %p55 = scmp.eq.s32.totalorder %s15, 0
    %p56 = por %p54, %p55
    %s58 = sadd.s32 %s57, 1
    %p61 = scmp.eq.s32.totalorder %s9, 3
    %p62 = scmp.ne.s32.totalorder %s57, %s59
    %p63 = scmp.eq.s32.totalorder %s9, 0
    %p64 = por %p62, %p63
    %p65 = scmp.ne.s32.totalorder %s57, %s59
    %p66 = scmp.eq.s32.totalorder %s14, 3
    %p67 = por %p65, %p66
    %p68 = scmp.ne.s32.totalorder %s59, %s60
    %p69 = scmp.eq.s32.totalorder %s14, 0
    %p70 = por %p68, %p69
    %p71 = scmp.ne.s32.totalorder %s59, %s60
    %p72 = scmp.eq.s32.totalorder %s15, 3
    %p73 = por %p71, %p72
    %p75 = scmp.ne.s32.totalorder %s60, %s74
    %p76 = scmp.eq.s32.totalorder %s15, 0
    %p77 = por %p75, %p76
    %s79 = sadd.s32 %s78, 1
    %p82 = scmp.eq.s32.totalorder %s9, 3
    %p83 = scmp.ne.s32.totalorder %s78, %s80
    %p84 = scmp.eq.s32.totalorder %s9, 0
    %p85 = por %p83, %p84
    %p86 = scmp.ne.s32.totalorder %s78, %s80
    %p87 = scmp.eq.s32.totalorder %s14, 3
    %p88 = por %p86, %p87
    %p89 = scmp.ne.s32.totalorder %s80, %s81
    %p90 = scmp.eq.s32.totalorder %s14, 0
    %p91 = por %p89, %p90
    %p92 = scmp.ne.s32.totalorder %s80, %s81
    %p93 = scmp.eq.s32.totalorder %s15, 3
    %p94 = por %p92, %p93
    %p96 = scmp.ne.s32.totalorder %s81, %s95
    %p97 = scmp.eq.s32.totalorder %s15, 0
    %p98 = por %p96, %p97
    %s99 = ssub.s32 %s16, %s28
    %s100 = ssub.s32 %s17, %s24
    %s101 = sor.u32 %s99, %s100
    %p102 = scmp.eq.s32.totalorder %s101, 0
    %s104 = sadd.s32 %s103, 1
    %s105 = scalar_select %p102, %s103, %s104
    %p108 = pneg %p102
    %p109 = scmp.eq.s32.totalorder %s9, 3
    %p110 = por %p108, %p109
    %p111 = scmp.ne.s32.totalorder %s103, %s106
    %p112 = scmp.eq.s32.totalorder %s9, 0
    %p113 = por %p111, %p112
    %p114 = scmp.ne.s32.totalorder %s103, %s106
    %p115 = scmp.eq.s32.totalorder %s14, 3
    %p116 = por %p114, %p115
    %p117 = scmp.ne.s32.totalorder %s106, %s107
    %p118 = scmp.eq.s32.totalorder %s14, 0
    %p119 = por %p117, %p118
    %p120 = scmp.ne.s32.totalorder %s106, %s107
    %p121 = scmp.eq.s32.totalorder %s15, 3
    %p122 = por %p120, %p121
    %p124 = scmp.ne.s32.totalorder %s107, %s123
    %p125 = scmp.eq.s32.totalorder %s15, 0
    %p126 = por %p124, %p125
    %p127 = scmp.le.s32.totalorder 1, %s9
    %p128 = scmp.lt.s32.totalorder %s9, 5
    %p129 = pnand %p127, %p128
    %p130 = pneg %p129
    // Predicated region
    $region9: #{aspp_module_forward.3} parent=5 // pred_check
      _
    $region10: #{aspp_module_forward.3} parent=5 // pred_check_branch
      %132 = sbr.rel (%p129) target = $region12
    $region11: #{aspp_module_forward.3} parent=5 // pred_region
      %s133 = ssub.s32 %s9, 1
      // Predicated region
      $region13: #{aspp_module_forward.3} parent=11 // pred_check
        %p134 = pneg %p70
      $region14: #{aspp_module_forward.3} parent=11 // pred_check_branch
        %136 = sbr.rel (%p134) target = $region16
      $region15: #{aspp_module_forward.3} parent=11 // pred_region
        _
      $region16: #{aspp_module_forward.3} parent=11 // pred_fallthru
        _
      // Predicated region
      $region17: #{aspp_module_forward.3} parent=11 // pred_check
        %p137 = pneg %p91
      $region18: #{aspp_module_forward.3} parent=11 // pred_check_branch
        %139 = sbr.rel (%p137) target = $region20
      $region19: #{aspp_module_forward.3} parent=11 // pred_region
        _
      $region20: #{aspp_module_forward.3} parent=11 // pred_fallthru
        _
    $region12: #{aspp_module_forward.3} parent=5 // pred_fallthru
      _
    %p140 = scmp.lt.s32.totalorder %s9, 4
    // Predicated region
    $region21: #{aspp_module_forward.3} parent=5 // pred_check
      %p141 = pneg %p140
    $region22: #{aspp_module_forward.3} parent=5 // pred_check_branch
      %143 = sbr.rel (%p141) target = $region24
    $region23: #{aspp_module_forward.3} parent=5 // pred_region
      // Predicated region
      $region25: #{aspp_module_forward.3} parent=23 // pred_check
        %p144 = pneg %p43
      $region26: #{aspp_module_forward.3} parent=23 // pred_check_branch
        %146 = sbr.rel (%p144) target = $region28
      $region27: #{aspp_module_forward.3} parent=23 // pred_region
        %s147 = smul.u32 8, %s17
        %p148 = scmp.lt.s32.totalorder %s16, 1
        %s149 = scalar_select %p148, %s16, 1
        %p150 = scmp.lt.s32.totalorder %s147, 15
        %s151 = scalar_select %p150, %s147, 15
        %s152 = smul.addr %s151, 2
        %s153 = smul.addr %s149, 32
        %s154 = sadd.s32 %s152, %s153
        %s155 = smul.addr %s154, 8
        %s156 = scalar_lea.vmem %s0, %s155
        %s157 = smul.u32 8, %s17
      $region28: #{aspp_module_forward.3} parent=23 // pred_fallthru
        _
    $region24: #{aspp_module_forward.3} parent=5 // pred_fallthru
      _
    %p158 = scmp.le.s32.totalorder 1, %s9
    %p159 = scmp.lt.s32.totalorder %s9, 5
    %p160 = pnand %p158, %p159
    %p161 = pneg %p160
    // Predicated region
    $region29: #{aspp_module_forward.3} parent=5 // pred_check
      _
    $region30: #{aspp_module_forward.3} parent=5 // pred_check_branch
      %163 = sbr.rel (%p160) target = $region32
    $region31: #{aspp_module_forward.3} parent=5 // pred_region
      %s164 = ssub.s32 %s9, 1
      %s165 = smul.u32 8, %s19
      %p166 = scmp.lt.s32.totalorder %s18, 1
      %s167 = scalar_select %p166, %s18, 1
      %p168 = scmp.lt.s32.totalorder %s165, 15
      %s169 = scalar_select %p168, %s165, 15
      %s170 = smul.addr %s169, 2
      %s171 = smul.addr %s167, 32
      %s172 = sadd.s32 %s170, %s171
      %s173 = smul.addr %s172, 8
      %s174 = scalar_lea.vmem %s0, %s173
      %p175 = pneg %p49
      %p176 = pneg %p46
      %p177 = pneg %p70
      %p178 = pneg %p67
      %p179 = pneg %p91
      %p180 = pneg %p88
      %p181 = pneg %p119
      %p182 = pneg %p116
      %s183 = smul.u32 8, %s19
      %p184 = scmp.lt.s32.totalorder %s18, 1
      %s185 = scalar_select %p184, %s18, 1
      %p186 = scmp.lt.s32.totalorder %s183, 15
      %s187 = scalar_select %p186, %s183, 15
      %s188 = smul.addr %s187, 2
      %s189 = smul.addr %s185, 32
      %s190 = sadd.s32 %s188, %s189
      %s191 = smul.addr %s190, 8
      %s192 = scalar_lea.vmem %s3, %s191
      %s193 = smul.u32 8, %s19
      %p194 = scmp.lt.s32.totalorder %s18, 1
      %s195 = scalar_select %p194, %s18, 1
      %p196 = scmp.lt.s32.totalorder %s193, 15
      %s197 = scalar_select %p196, %s193, 15
      %s198 = smul.addr %s197, 2
      %s199 = smul.addr %s195, 32
      %s200 = sadd.s32 %s198, %s199
      %s201 = smul.addr %s200, 8
      %s202 = scalar_lea.vmem %s0, %s201
      %s203 = smul.u32 8, %s19
      %s204 = smul.u32 8, %s19
      %p205 = scmp.lt.s32.totalorder %s18, 1
      %s206 = scalar_select %p205, %s18, 1
      %p207 = scmp.lt.s32.totalorder %s204, 15
      %s208 = scalar_select %p207, %s204, 15
      %s209 = smul.addr %s208, 2
      %s210 = smul.addr %s206, 32
      %s211 = sadd.s32 %s209, %s210
      %s212 = smul.addr %s211, 8
      %s213 = scalar_lea.vmem %s3, %s212
      %s214 = smul.u32 8, %s19
      %v215 = vld [vmem:[%s1] sm:$0x1]
      %v216 = vld [vmem:[%s2] sm:$0x1]
      %v217 = vld [vmem:[%s202] sm:$0xff]
      %v218 = vld [vmem:[%s202 + $0x8] sm:$0xff]
      %v219 = vld [vmem:[%s202 + $0x10] sm:$0xff]
      %v220 = vld [vmem:[%s202 + $0x18] sm:$0xff]
      %v221 = vld [vmem:[%s202 + $0x20] sm:$0xff]
      %v222 = vld [vmem:[%s202 + $0x28] sm:$0xff]
      %v223 = vld [vmem:[%s202 + $0x30] sm:$0xff]
      %v224 = vld [vmem:[%s202 + $0x38] sm:$0xff]
      %v225 = vld [vmem:[%s202 + $0x40] sm:$0xff]
      %v226 = vld [vmem:[%s202 + $0x48] sm:$0xff]
      %v227 = vld [vmem:[%s202 + $0x50] sm:$0xff]
      %v228 = vld [vmem:[%s202 + $0x58] sm:$0xff]
      %v229 = vld [vmem:[%s202 + $0x60] sm:$0xff]
      %v230 = vld [vmem:[%s202 + $0x68] sm:$0xff]
      %v231 = vld [vmem:[%s202 + $0x70] sm:$0xff]
      %v232 = vld [vmem:[%s202 + $0x78] sm:$0xff]
      %v234 = vlaneseq
      %v235 = vshrl.u32 %v234, 7
      %v236 = vsub.s32 0, %v235
      %v237 = vrot.slane %v215, %v236
      %v239 = vmul.f32 %v217, %v237
      %v240 = vmul.f32 %v218, %v237
      %v241 = vmul.f32 %v219, %v237
      %v242 = vmul.f32 %v220, %v237
      %v243 = vmul.f32 %v221, %v237
      %v244 = vmul.f32 %v222, %v237
      %v245 = vmul.f32 %v223, %v237
      %v246 = vmul.f32 %v224, %v237
      %v247 = vmul.f32 %v225, %v237
      %v248 = vmul.f32 %v226, %v237
      %v249 = vmul.f32 %v227, %v237
      %v250 = vmul.f32 %v228, %v237
      %v251 = vmul.f32 %v229, %v237
      %v252 = vmul.f32 %v230, %v237
      %v253 = vmul.f32 %v231, %v237
      %v254 = vmul.f32 %v232, %v237
      %v256 = vlaneseq
      %v257 = vshrl.u32 %v256, 7
      %v258 = vsub.s32 0, %v257
      %v259 = vrot.slane %v216, %v258
      %v261 = vadd.f32 %v239, %v259
      %v262 = vadd.f32 %v240, %v259
      %v263 = vadd.f32 %v241, %v259
      %v264 = vadd.f32 %v242, %v259
      %v265 = vadd.f32 %v243, %v259
      %v266 = vadd.f32 %v244, %v259
      %v267 = vadd.f32 %v245, %v259
      %v268 = vadd.f32 %v246, %v259
      %v269 = vadd.f32 %v247, %v259
      %v270 = vadd.f32 %v248, %v259
      %v271 = vadd.f32 %v249, %v259
      %v272 = vadd.f32 %v250, %v259
      %v273 = vadd.f32 %v251, %v259
      %v274 = vadd.f32 %v252, %v259
      %v275 = vadd.f32 %v253, %v259
      %v276 = vadd.f32 %v254, %v259
      %v277 = vmax.f32 %v261, 0.0
      %v278 = vmax.f32 %v262, 0.0
      %v279 = vmax.f32 %v263, 0.0
      %v280 = vmax.f32 %v264, 0.0
      %v281 = vmax.f32 %v265, 0.0
      %v282 = vmax.f32 %v266, 0.0
      %v283 = vmax.f32 %v267, 0.0
      %v284 = vmax.f32 %v268, 0.0
      %v285 = vmax.f32 %v269, 0.0
      %v286 = vmax.f32 %v270, 0.0
      %v287 = vmax.f32 %v271, 0.0
      %v288 = vmax.f32 %v272, 0.0
      %v289 = vmax.f32 %v273, 0.0
      %v290 = vmax.f32 %v274, 0.0
      %v291 = vmax.f32 %v275, 0.0
      %v292 = vmax.f32 %v276, 0.0
      %293 = vst [vmem:[%s213] sm:$0xff] %v277
      %294 = vst [vmem:[%s213 + $0x8] sm:$0xff] %v278
      %295 = vst [vmem:[%s213 + $0x10] sm:$0xff] %v279
      %296 = vst [vmem:[%s213 + $0x18] sm:$0xff] %v280
      %297 = vst [vmem:[%s213 + $0x20] sm:$0xff] %v281
      %298 = vst [vmem:[%s213 + $0x28] sm:$0xff] %v282
      %299 = vst [vmem:[%s213 + $0x30] sm:$0xff] %v283
      %300 = vst [vmem:[%s213 + $0x38] sm:$0xff] %v284
      %301 = vst [vmem:[%s213 + $0x40] sm:$0xff] %v285
      %302 = vst [vmem:[%s213 + $0x48] sm:$0xff] %v286
      %303 = vst [vmem:[%s213 + $0x50] sm:$0xff] %v287
      %304 = vst [vmem:[%s213 + $0x58] sm:$0xff] %v288
      %305 = vst [vmem:[%s213 + $0x60] sm:$0xff] %v289
      %306 = vst [vmem:[%s213 + $0x68] sm:$0xff] %v290
      %307 = vst [vmem:[%s213 + $0x70] sm:$0xff] %v291
      %308 = vst [vmem:[%s213 + $0x78] sm:$0xff] %v292
      %s309 = smul.u32 8, %s19
      %p310 = scmp.lt.s32.totalorder %s18, 1
      %s311 = scalar_select %p310, %s18, 1
      %p312 = scmp.lt.s32.totalorder %s309, 15
      %s313 = scalar_select %p312, %s309, 15
      %s314 = smul.addr %s313, 2
      %s315 = smul.addr %s311, 32
      %s316 = sadd.s32 %s314, %s315
      %s317 = smul.addr %s316, 8
      %s318 = scalar_lea.vmem %s3, %s317
      // Predicated region
      $region33: #{aspp_module_forward.3} parent=31 // pred_check
        %p319 = pneg %p116
      $region34: #{aspp_module_forward.3} parent=31 // pred_check_branch
        %321 = sbr.rel (%p319) target = $region36
      $region35: #{aspp_module_forward.3} parent=31 // pred_region
        %s322 = smul.u32 8, %s19
      $region36: #{aspp_module_forward.3} parent=31 // pred_fallthru
        _
    $region32: #{aspp_module_forward.3} parent=5 // pred_fallthru
      _
    %p323 = scmp.le.s32.totalorder 2, %s9
    // Predicated region
    $region37: #{aspp_module_forward.3} parent=5 // pred_check
      %p324 = pneg %p323
    $region38: #{aspp_module_forward.3} parent=5 // pred_check_branch
      %326 = sbr.rel (%p324) target = $region40
    $region39: #{aspp_module_forward.3} parent=5 // pred_region
      %s327 = ssub.s32 %s9, 2
      // Predicated region
      $region41: #{aspp_module_forward.3} parent=39 // pred_check
        %p328 = pneg %p122
      $region42: #{aspp_module_forward.3} parent=39 // pred_check_branch
        %330 = sbr.rel (%p328) target = $region44
      $region43: #{aspp_module_forward.3} parent=39 // pred_region
        %s331 = smul.u32 8, %s21
        %p332 = scmp.lt.s32.totalorder %s20, 1
        %s333 = scalar_select %p332, %s20, 1
        %p334 = scmp.lt.s32.totalorder %s331, 15
        %s335 = scalar_select %p334, %s331, 15
        %s336 = smul.addr %s335, 2
        %s337 = smul.addr %s333, 32
        %s338 = sadd.s32 %s336, %s337
        %s339 = smul.addr %s338, 8
        %s340 = scalar_lea.vmem %s3, %s339
      $region44: #{aspp_module_forward.3} parent=39 // pred_fallthru
        _
    $region40: #{aspp_module_forward.3} parent=5 // pred_fallthru
      _
  $region6: #{aspp_module_forward.3} parent=0 // loop_footer
    %s13 = sadd.s32 1, %s9
  $region7: #{aspp_module_forward.3} parent=0 // loop_footer_branch
    %8 = sbr.rel target = $region3
  $region8: #{aspp_module_forward.3} parent=0 // loop_exit
    _

// kernel: aspp_module_forward.2
$region0: #{aspp_module_forward.2}
  #allocation0 [shape = 'u32[]', space=smem, size = 0x4, offset = 0x4, fixed_abs, tag = 'smem constant byte address 0x4 - core index']
  #allocation1 [shape = 'u32[144,128]{1,0:T(1,128)}', space=vmem, size = 0x12000, scoped, tag = 'internal scratch']
  #allocation2 [shape = 'bf16[128,36]{1,0:T(16,128)(2,1)}', space=vmem, size = 0x8000, scoped, tag = 'scratch operand']
  %s0 = inlined_call_operand.vmem [shape: bf16[2,20,20,4], index: 0, kind: input, shape index: {}]
  %s1 = inlined_call_operand.vmem [shape: bf16[9,4,128], index: 1, kind: input, shape index: {}]
  %s2 = inlined_call_operand.vmem [shape: f32[2,16,16,128], index: 2, kind: output, shape index: {0}]
  %s3 = inlined_call_operand.vmem [shape: f32[2,2,8,128], index: 3, kind: output, shape index: {1}]
  %4 = xla_tuple %s2, %s3
  %s5 = sld [smem:[#allocation0]]
  $region49: #{aspp_module_forward.2} parent=0
    _
  %s7 = ssub.s32 1, %s5
  %s8 = scalar_select 0, %s7, %s5
  loop: start=0, step=1, limit=6
  $region2: #{aspp_module_forward.2} parent=0 // loop_pre_header
    _
  $region3: #{aspp_module_forward.2} parent=0 // loop_header
    %s10 = sphi 0, %s14
    %p11 = scmp.ge.s32.totalorder %s10, 6
    %s17 = sphi 0, %s29
    %s18 = sphi 0, %s25
    %s19 = sphi 0, %s17
    %s20 = sphi 0, %s18
    %s21 = sphi 0, %s19
    %s22 = sphi 0, %s20
    %s32 = sphi 0, %s34
    %s35 = sphi 0, %s32
    %s36 = sphi 0, %s35
    %s52 = sphi 0, %s36
    %s56 = sphi 0, %s56
    %s58 = sphi 0, %s56
    %s59 = sphi 0, %s58
    %s73 = sphi 0, %s59
    %s81 = sphi 0, %s83
    %s84 = sphi 0, %s81
    %s85 = sphi 0, %s84
    %s101 = sphi 0, %s85
    %s109 = sphi 0, %s111
    %s112 = sphi 0, %s109
    %s113 = sphi 0, %s112
    %s129 = sphi 0, %s113
  $region4: #{aspp_module_forward.2} parent=0 // loop_header_branch
    %13 = sbr.rel (%p11) target = $region8
  $region5: #{aspp_module_forward.2} parent=0 // loop_body
    %s15 = ssub.s32 %s10, 1
    %s16 = ssub.s32 %s10, 2
    %s23 = sadd.s32 1, %s18
    %p24 = scmp.ge.s32.totalorder %s23, 2
    %s25 = scalar_select %p24, 0, %s23
    %s26 = sadd.s32 1, %s17
    %s27 = scalar_select %p24, %s26, %s17
    %p28 = scmp.ge.s32.totalorder %s27, 2
    %s29 = scalar_select %p28, 0, %s27
    %s30 = ssub.s32 %s17, %s29
    %p31 = scmp.eq.s32.totalorder %s30, 0
    %s33 = sadd.s32 %s32, 1
    %s34 = scalar_select %p31, %s32, %s33
    %p37 = pneg %p31
    %p38 = scmp.eq.s32.totalorder %s10, 3
    %p39 = por %p37, %p38
    %p40 = scmp.ne.s32.totalorder %s32, %s35
    %p41 = scmp.eq.s32.totalorder %s10, 0
    %p42 = por %p40, %p41
    %p43 = scmp.ne.s32.totalorder %s32, %s35
    %p44 = scmp.eq.s32.totalorder %s15, 3
    %p45 = por %p43, %p44
    %p46 = scmp.ne.s32.totalorder %s35, %s36
    %p47 = scmp.eq.s32.totalorder %s15, 0
    %p48 = por %p46, %p47
    %p49 = scmp.ne.s32.totalorder %s35, %s36
    %p50 = scmp.eq.s32.totalorder %s16, 3
    %p51 = por %p49, %p50
    %p53 = scmp.ne.s32.totalorder %s36, %s52
    %p54 = scmp.eq.s32.totalorder %s16, 0
    %p55 = por %p53, %p54
    %s57 = sadd.s32 %s56, 1
    %p60 = scmp.eq.s32.totalorder %s10, 3
    %p61 = scmp.ne.s32.totalorder %s56, %s58
    %p62 = scmp.eq.s32.totalorder %s10, 0
    %p63 = por %p61, %p62
    %p64 = scmp.ne.s32.totalorder %s56, %s58
    %p65 = scmp.eq.s32.totalorder %s15, 3
    %p66 = por %p64, %p65
    %p67 = scmp.ne.s32.totalorder %s58, %s59
    %p68 = scmp.eq.s32.totalorder %s15, 0
    %p69 = por %p67, %p68
    %p70 = scmp.ne.s32.totalorder %s58, %s59
    %p71 = scmp.eq.s32.totalorder %s16, 3
    %p72 = por %p70, %p71
    %p74 = scmp.ne.s32.totalorder %s59, %s73
    %p75 = scmp.eq.s32.totalorder %s16, 0
    %p76 = por %p74, %p75
    %s77 = ssub.s32 %s17, %s29
    %s78 = ssub.s32 %s18, %s25
    %s79 = sor.u32 %s77, %s78
    %p80 = scmp.eq.s32.totalorder %s79, 0
    %s82 = sadd.s32 %s81, 1
    %s83 = scalar_select %p80, %s81, %s82
    %p86 = pneg %p80
    %p87 = scmp.eq.s32.totalorder %s10, 3
    %p88 = por %p86, %p87
    %p89 = scmp.ne.s32.totalorder %s81, %s84
    %p90 = scmp.eq.s32.totalorder %s10, 0
    %p91 = por %p89, %p90
    %p92 = scmp.ne.s32.totalorder %s81, %s84
    %p93 = scmp.eq.s32.totalorder %s15, 3
    %p94 = por %p92, %p93
    %p95 = scmp.ne.s32.totalorder %s84, %s85
    %p96 = scmp.eq.s32.totalorder %s15, 0
    %p97 = por %p95, %p96
    %p98 = scmp.ne.s32.totalorder %s84, %s85
    %p99 = scmp.eq.s32.totalorder %s16, 3
    %p100 = por %p98, %p99
    %p102 = scmp.ne.s32.totalorder %s85, %s101
    %p103 = scmp.eq.s32.totalorder %s16, 0
    %p104 = por %p102, %p103
    %s105 = ssub.s32 %s17, %s29
    %s106 = ssub.s32 %s18, %s25
    %s107 = sor.u32 %s105, %s106
    %p108 = scmp.eq.s32.totalorder %s107, 0
    %s110 = sadd.s32 %s109, 1
    %s111 = scalar_select %p108, %s109, %s110
    %p114 = pneg %p108
    %p115 = scmp.eq.s32.totalorder %s10, 3
    %p116 = por %p114, %p115
    %p117 = scmp.ne.s32.totalorder %s109, %s112
    %p118 = scmp.eq.s32.totalorder %s10, 0
    %p119 = por %p117, %p118
    %p120 = scmp.ne.s32.totalorder %s109, %s112
    %p121 = scmp.eq.s32.totalorder %s15, 3
    %p122 = por %p120, %p121
    %p123 = scmp.ne.s32.totalorder %s112, %s113
    %p124 = scmp.eq.s32.totalorder %s15, 0
    %p125 = por %p123, %p124
    %p126 = scmp.ne.s32.totalorder %s112, %s113
    %p127 = scmp.eq.s32.totalorder %s16, 3
    %p128 = por %p126, %p127
    %p130 = scmp.ne.s32.totalorder %s113, %s129
    %p131 = scmp.eq.s32.totalorder %s16, 0
    %p132 = por %p130, %p131
    %p133 = scmp.le.s32.totalorder 1, %s10
    %p134 = scmp.lt.s32.totalorder %s10, 5
    %p135 = pnand %p133, %p134
    %p136 = pneg %p135
    // Predicated region
    $region9: #{aspp_module_forward.2} parent=5 // pred_check
      _
    $region10: #{aspp_module_forward.2} parent=5 // pred_check_branch
      %138 = sbr.rel (%p135) target = $region12
    $region11: #{aspp_module_forward.2} parent=5 // pred_region
      %s139 = ssub.s32 %s10, 1
      // Predicated region
      $region13: #{aspp_module_forward.2} parent=11 // pred_check
        %p140 = pneg %p69
      $region14: #{aspp_module_forward.2} parent=11 // pred_check_branch
        %142 = sbr.rel (%p140) target = $region16
      $region15: #{aspp_module_forward.2} parent=11 // pred_region
        _
      $region16: #{aspp_module_forward.2} parent=11 // pred_fallthru
        _
    $region12: #{aspp_module_forward.2} parent=5 // pred_fallthru
      _
    %p143 = scmp.lt.s32.totalorder %s10, 4
    // Predicated region
    $region17: #{aspp_module_forward.2} parent=5 // pred_check
      %p144 = pneg %p143
    $region18: #{aspp_module_forward.2} parent=5 // pred_check_branch
      %146 = sbr.rel (%p144) target = $region20
    $region19: #{aspp_module_forward.2} parent=5 // pred_region
      // Predicated region
      $region21: #{aspp_module_forward.2} parent=19 // pred_check
        %p147 = pneg %p42
      $region22: #{aspp_module_forward.2} parent=19 // pred_check_branch
        %149 = sbr.rel (%p147) target = $region24
      $region23: #{aspp_module_forward.2} parent=19 // pred_region
        %p150 = scmp.lt.s32.totalorder %s17, 1
        %s151 = scalar_select %p150, %s17, 1
        %s152 = smul.addr %s151, 60
        %s153 = smul.addr %s152, 4
        %s154 = scalar_lea.vmem %s0, %s153
      $region24: #{aspp_module_forward.2} parent=19 // pred_fallthru
        _
    $region20: #{aspp_module_forward.2} parent=5 // pred_fallthru
      _
    %p155 = scmp.le.s32.totalorder 1, %s10
    %p156 = scmp.lt.s32.totalorder %s10, 5
    %p157 = pnand %p155, %p156
    %p158 = pneg %p157
    // Predicated region
    $region25: #{aspp_module_forward.2} parent=5 // pred_check
      _
    $region26: #{aspp_module_forward.2} parent=5 // pred_check_branch
      %160 = sbr.rel (%p157) target = $region28
    $region27: #{aspp_module_forward.2} parent=5 // pred_region
      %s161 = ssub.s32 %s10, 1
      %p162 = scmp.lt.s32.totalorder %s19, 1
      %s163 = scalar_select %p162, %s19, 1
      %s164 = smul.addr %s163, 60
      %s165 = smul.addr %s164, 4
      %s166 = scalar_lea.vmem %s0, %s165
      %p167 = pneg %p48
      %p168 = pneg %p45
      %p169 = pneg %p69
      %p170 = pneg %p66
      %p171 = pneg %p97
      %p172 = pneg %p94
      %s173 = smul.u32 8, %s20
      %p174 = scmp.lt.s32.totalorder %s19, 1
      %s175 = scalar_select %p174, %s19, 1
      %p176 = scmp.lt.s32.totalorder %s173, 15
      %s177 = scalar_select %p176, %s173, 15
      %s178 = smul.addr %s177, 2
      %s179 = smul.addr %s175, 32
      %s180 = sadd.s32 %s178, %s179
      %s181 = smul.addr %s180, 8
      %s182 = scalar_lea.vmem %s2, %s181
      %p183 = pneg %p125
      %p184 = pneg %p122
      %p185 = scmp.lt.s32.totalorder %s19, 1
      %s186 = scalar_select %p185, %s19, 1
      %p187 = scmp.lt.s32.totalorder %s20, 1
      %s188 = scalar_select %p187, %s20, 1
      %s189 = smul.addr %s186, 2
      %s190 = sadd.s32 %s188, %s189
      %s191 = smul.addr %s190, 8
      %s192 = scalar_lea.vmem %s3, %s191
      %p193 = scmp.lt.s32.totalorder %s19, 1
      %s194 = scalar_select %p193, %s19, 1
      %s195 = smul.addr %s194, 60
      %s196 = smul.addr %s195, 4
      %s197 = scalar_lea.vmem %s0, %s196
      %s198 = smul.u32 8, %s20
      %p199 = scmp.lt.s32.totalorder %s19, 1
      %s200 = scalar_select %p199, %s19, 1
      %p201 = scmp.lt.s32.totalorder %s198, 15
      %s202 = scalar_select %p201, %s198, 15
      %s203 = smul.addr %s202, 2
      %s204 = smul.addr %s200, 32
      %s205 = sadd.s32 %s203, %s204
      %s206 = smul.addr %s205, 8
      %s207 = scalar_lea.vmem %s2, %s206
      %s208 = smul.u32 8, %s20
      %p209 = scmp.lt.s32.totalorder %s19, 1
      %s210 = scalar_select %p209, %s19, 1
      %p211 = scmp.lt.s32.totalorder %s20, 1
      %s212 = scalar_select %p211, %s20, 1
      %s213 = smul.addr %s210, 2
      %s214 = sadd.s32 %s212, %s213
      %s215 = smul.addr %s214, 8
      %s216 = scalar_lea.vmem %s3, %s215
      %s218 = smul.u32 %s20, 8
      %s219 = smul.u32 %s218, 3
      %s220 = smul.addr %s219, 4
      %s221 = scalar_lea.vmem %s197, %s220
      %v222 = vld [vmem:[%s221] sm:$0xf]
      %v223 = vld [vmem:[%s221 + $0x4] sm:$0xf]
      %v224 = vld [vmem:[%s221 + $0xc] sm:$0xf]
      %v225 = vld [vmem:[%s221 + $0x10] sm:$0xf]
      %v226 = vld [vmem:[%s221 + $0x18] sm:$0xf]
      %v227 = vld [vmem:[%s221 + $0x1c] sm:$0xf]
      %v228 = vld [vmem:[%s221 + $0x24] sm:$0xf]
      %v229 = vld [vmem:[%s221 + $0x28] sm:$0xf]
      %v230 = vld [vmem:[%s221 + $0x30] sm:$0xf]
      %v231 = vld [vmem:[%s221 + $0x34] sm:$0xf]
      %v232 = vld [vmem:[%s221 + $0x3c] sm:$0xf]
      %v233 = vld [vmem:[%s221 + $0x40] sm:$0xf]
      %v234 = vld [vmem:[%s221 + $0x48] sm:$0xf]
      %v235 = vld [vmem:[%s221 + $0x4c] sm:$0xf]
      %v236 = vld [vmem:[%s221 + $0x54] sm:$0xf]
      %v237 = vld [vmem:[%s221 + $0x58] sm:$0xf]
      %v254 = vunpack.c.l.b16 %v222
      %v255 = vunpack.c.l.b16 %v223
      %v256 = vunpack.c.l.b16 %v224
      %v257 = vunpack.c.l.b16 %v225
      %v258 = vunpack.c.l.b16 %v226
      %v259 = vunpack.c.l.b16 %v227
      %v260 = vunpack.c.l.b16 %v228
      %v261 = vunpack.c.l.b16 %v229
      %v262 = vunpack.c.l.b16 %v230
      %v263 = vunpack.c.l.b16 %v231
      %v264 = vunpack.c.l.b16 %v232
      %v265 = vunpack.c.l.b16 %v233
      %v266 = vunpack.c.l.b16 %v234
      %v267 = vunpack.c.l.b16 %v235
      %v268 = vunpack.c.l.b16 %v236
      %v269 = vunpack.c.l.b16 %v237
      %v270 = vpack.c.b16 %v255, %v254
      %v271 = vpack.c.b16 %v257, %v256
      %v272 = vpack.c.b16 %v259, %v258
      %v273 = vpack.c.b16 %v261, %v260
      %v274 = vpack.c.b16 %v263, %v262
      %v275 = vpack.c.b16 %v265, %v264
      %v276 = vpack.c.b16 %v267, %v266
      %v277 = vpack.c.b16 %v269, %v268
      %vm286 = vcmask 31744
      %287 = vst.msk [vmem:[#allocation2] sm:$0xff] %vm286, %v270
      %288 = vst.msk [vmem:[#allocation2 + $0x8] sm:$0xff] %vm286, %v271
      %289 = vst.msk [vmem:[#allocation2 + $0x10] sm:$0xff] %vm286, %v272
      %290 = vst.msk [vmem:[#allocation2 + $0x18] sm:$0xff] %vm286, %v273
      %291 = vst.msk [vmem:[#allocation2 + $0x20] sm:$0xff] %vm286, %v274
      %292 = vst.msk [vmem:[#allocation2 + $0x28] sm:$0xff] %vm286, %v275
      %293 = vst.msk [vmem:[#allocation2 + $0x30] sm:$0xff] %vm286, %v276
      %294 = vst.msk [vmem:[#allocation2 + $0x38] sm:$0xff] %vm286, %v277
      %v295 = vld [vmem:[%s221] sm:$0xe]
      %v296 = vld [vmem:[%s221 + $0x4] sm:$0xf]
      %v297 = vld [vmem:[%s221 + $0x8] sm:$0x1]
      %v298 = vld [vmem:[%s221 + $0xc] sm:$0xe]
      %v299 = vld [vmem:[%s221 + $0x10] sm:$0xf]
      %v300 = vld [vmem:[%s221 + $0x14] sm:$0x1]
      %v301 = vld [vmem:[%s221 + $0x18] sm:$0xe]
      %v302 = vld [vmem:[%s221 + $0x1c] sm:$0xf]
      %v303 = vld [vmem:[%s221 + $0x20] sm:$0x1]
      %v304 = vld [vmem:[%s221 + $0x24] sm:$0xe]
      %v305 = vld [vmem:[%s221 + $0x28] sm:$0xf]
      %v306 = vld [vmem:[%s221 + $0x2c] sm:$0x1]
      %v307 = vld [vmem:[%s221 + $0x30] sm:$0xe]
      %v308 = vld [vmem:[%s221 + $0x34] sm:$0xf]
      %v309 = vld [vmem:[%s221 + $0x38] sm:$0x1]
      %v310 = vld [vmem:[%s221 + $0x3c] sm:$0xe]
      %v311 = vld [vmem:[%s221 + $0x40] sm:$0xf]
      %v312 = vld [vmem:[%s221 + $0x44] sm:$0x1]
      %v313 = vld [vmem:[%s221 + $0x48] sm:$0xe]
      %v314 = vld [vmem:[%s221 + $0x4c] sm:$0xf]
      %v315 = vld [vmem:[%s221 + $0x50] sm:$0x1]
      %v316 = vld [vmem:[%s221 + $0x54] sm:$0xe]
      %v317 = vld [vmem:[%s221 + $0x58] sm:$0xf]
      %v318 = vld [vmem:[%s221 + $0x5c] sm:$0x1]
      %vm343 = vcmask 1042432
      %vm344 = vcmask 1046532
      %vm345 = vmor %vm343, %vm344
      %v346 = vrot.slane %v295, 5
      %v347 = vrot.slane %v346, 4
      %v348 = vrot.slane %v296, 5
      %v349 = vsel %vm345, %v347, %v348
      %v350 = vrot.slane %v348, 4
      %v351 = vrot.slane %v297, 5
      %v352 = vsel %vm345, %v350, %v351
      %v353 = vrot.slane %v298, 5
      %v354 = vrot.slane %v353, 4
      %v355 = vrot.slane %v299, 5
      %v356 = vsel %vm345, %v354, %v355
      %v357 = vrot.slane %v355, 4
      %v358 = vrot.slane %v300, 5
      %v359 = vsel %vm345, %v357, %v358
      %v360 = vrot.slane %v301, 5
      %v361 = vrot.slane %v360, 4
      %v362 = vrot.slane %v302, 5
      %v363 = vsel %vm345, %v361, %v362
      %v364 = vrot.slane %v362, 4
      %v365 = vrot.slane %v303, 5
      %v366 = vsel %vm345, %v364, %v365
      %v367 = vrot.slane %v304, 5
      %v368 = vrot.slane %v367, 4
      %v369 = vrot.slane %v305, 5
      %v370 = vsel %vm345, %v368, %v369
      %v371 = vrot.slane %v369, 4
      %v372 = vrot.slane %v306, 5
      %v373 = vsel %vm345, %v371, %v372
      %v374 = vrot.slane %v307, 5
      %v375 = vrot.slane %v374, 4
      %v376 = vrot.slane %v308, 5
      %v377 = vsel %vm345, %v375, %v376
      %v378 = vrot.slane %v376, 4
      %v379 = vrot.slane %v309, 5
      %v380 = vsel %vm345, %v378, %v379
      %v381 = vrot.slane %v310, 5
      %v382 = vrot.slane %v381, 4
      %v383 = vrot.slane %v311, 5
      %v384 = vsel %vm345, %v382, %v383
      %v385 = vrot.slane %v383, 4
      %v386 = vrot.slane %v312, 5
      %v387 = vsel %vm345, %v385, %v386
      %v388 = vrot.slane %v313, 5
      %v389 = vrot.slane %v388, 4
      %v390 = vrot.slane %v314, 5
      %v391 = vsel %vm345, %v389, %v390
      %v392 = vrot.slane %v390, 4
      %v393 = vrot.slane %v315, 5
      %v394 = vsel %vm345, %v392, %v393
      %v395 = vrot.slane %v316, 5
      %v396 = vrot.slane %v395, 4
      %v397 = vrot.slane %v317, 5
      %v398 = vsel %vm345, %v396, %v397
      %v399 = vrot.slane %v397, 4
      %v400 = vrot.slane %v318, 5
      %v401 = vsel %vm345, %v399, %v400
      %v402 = vunpack.c.l.b16 %v349
      %v403 = vunpack.c.l.b16 %v352
      %v404 = vunpack.c.l.b16 %v356
      %v405 = vunpack.c.l.b16 %v359
      %v406 = vunpack.c.l.b16 %v363
      %v407 = vunpack.c.l.b16 %v366
      %v408 = vunpack.c.l.b16 %v370
      %v409 = vunpack.c.l.b16 %v373
      %v410 = vunpack.c.l.b16 %v377
      %v411 = vunpack.c.l.b16 %v380
      %v412 = vunpack.c.l.b16 %v384
      %v413 = vunpack.c.l.b16 %v387
      %v414 = vunpack.c.l.b16 %v391
      %v415 = vunpack.c.l.b16 %v394
      %v416 = vunpack.c.l.b16 %v398
      %v417 = vunpack.c.l.b16 %v401
      %v418 = vpack.c.b16 %v403, %v402
      %v419 = vpack.c.b16 %v405, %v404
      %v420 = vpack.c.b16 %v407, %v406
      %v421 = vpack.c.b16 %v409, %v408
      %v422 = vpack.c.b16 %v411, %v410
      %v423 = vpack.c.b16 %v413, %v412
      %v424 = vpack.c.b16 %v415, %v414
      %v425 = vpack.c.b16 %v417, %v416
      %426 = vrot.lane.b32.xlu0 %v418, 4
      %v427 = vpop.permute.xlu0 %426
      %428 = vrot.lane.b32.xlu0 %v419, 4
      %v429 = vpop.permute.xlu0 %428
      %430 = vrot.lane.b32.xlu0 %v420, 4
      %v431 = vpop.permute.xlu0 %430
      %432 = vrot.lane.b32.xlu0 %v421, 4
      %v433 = vpop.permute.xlu0 %432
      %434 = vrot.lane.b32.xlu0 %v422, 4
      %v435 = vpop.permute.xlu0 %434
      %436 = vrot.lane.b32.xlu0 %v423, 4
      %v437 = vpop.permute.xlu0 %436
      %438 = vrot.lane.b32.xlu0 %v424, 4
      %v439 = vpop.permute.xlu0 %438
      %440 = vrot.lane.b32.xlu0 %v425, 4
      %v441 = vpop.permute.xlu0 %440
      %vm450 = vcmask 64544
      %451 = vst.msk [vmem:[#allocation2] sm:$0xff] %vm450, %v427
      %452 = vst.msk [vmem:[#allocation2 + $0x8] sm:$0xff] %vm450, %v429
      %453 = vst.msk [vmem:[#allocation2 + $0x10] sm:$0xff] %vm450, %v431
      %454 = vst.msk [vmem:[#allocation2 + $0x18] sm:$0xff] %vm450, %v433
      %455 = vst.msk [vmem:[#allocation2 + $0x20] sm:$0xff] %vm450, %v435
      %456 = vst.msk [vmem:[#allocation2 + $0x28] sm:$0xff] %vm450, %v437
      %457 = vst.msk [vmem:[#allocation2 + $0x30] sm:$0xff] %vm450, %v439
      %458 = vst.msk [vmem:[#allocation2 + $0x38] sm:$0xff] %vm450, %v441
      %v459 = vld [vmem:[%s221] sm:$0xc]
      %v460 = vld [vmem:[%s221 + $0x4] sm:$0xf]
      %v461 = vld [vmem:[%s221 + $0x8] sm:$0x3]
      %v462 = vld [vmem:[%s221 + $0xc] sm:$0xc]
      %v463 = vld [vmem:[%s221 + $0x10] sm:$0xf]
      %v464 = vld [vmem:[%s221 + $0x14] sm:$0x3]
      %v465 = vld [vmem:[%s221 + $0x18] sm:$0xc]
      %v466 = vld [vmem:[%s221 + $0x1c] sm:$0xf]
      %v467 = vld [vmem:[%s221 + $0x20] sm:$0x3]
      %v468 = vld [vmem:[%s221 + $0x24] sm:$0xc]
      %v469 = vld [vmem:[%s221 + $0x28] sm:$0xf]
      %v470 = vld [vmem:[%s221 + $0x2c] sm:$0x3]
      %v471 = vld [vmem:[%s221 + $0x30] sm:$0xc]
      %v472 = vld [vmem:[%s221 + $0x34] sm:$0xf]
      %v473 = vld [vmem:[%s221 + $0x38] sm:$0x3]
      %v474 = vld [vmem:[%s221 + $0x3c] sm:$0xc]
      %v475 = vld [vmem:[%s221 + $0x40] sm:$0xf]
      %v476 = vld [vmem:[%s221 + $0x44] sm:$0x3]
      %v477 = vld [vmem:[%s221 + $0x48] sm:$0xc]
      %v478 = vld [vmem:[%s221 + $0x4c] sm:$0xf]
      %v479 = vld [vmem:[%s221 + $0x50] sm:$0x3]
      %v480 = vld [vmem:[%s221 + $0x54] sm:$0xc]
      %v481 = vld [vmem:[%s221 + $0x58] sm:$0xf]
      %v482 = vld [vmem:[%s221 + $0x5c] sm:$0x3]
      %vm507 = vcmask 1041408
      %vm508 = vcmask 1045508
      %vm509 = vmor %vm507, %vm508
      %v510 = vrot.slane %v459, 6
      %v511 = vrot.slane %v510, 4
      %v512 = vrot.slane %v460, 6
      %v513 = vsel %vm509, %v511, %v512
      %v514 = vrot.slane %v512, 4
      %v515 = vrot.slane %v461, 6
      %v516 = vsel %vm509, %v514, %v515
      %v517 = vrot.slane %v462, 6
      %v518 = vrot.slane %v517, 4
      %v519 = vrot.slane %v463, 6
      %v520 = vsel %vm509, %v518, %v519
      %v521 = vrot.slane %v519, 4
      %v522 = vrot.slane %v464, 6
      %v523 = vsel %vm509, %v521, %v522
      %v524 = vrot.slane %v465, 6
      %v525 = vrot.slane %v524, 4
      %v526 = vrot.slane %v466, 6
      %v527 = vsel %vm509, %v525, %v526
      %v528 = vrot.slane %v526, 4
      %v529 = vrot.slane %v467, 6
      %v530 = vsel %vm509, %v528, %v529
      %v531 = vrot.slane %v468, 6
      %v532 = vrot.slane %v531, 4
      %v533 = vrot.slane %v469, 6
      %v534 = vsel %vm509, %v532, %v533
      %v535 = vrot.slane %v533, 4
      %v536 = vrot.slane %v470, 6
      %v537 = vsel %vm509, %v535, %v536
      %v538 = vrot.slane %v471, 6
      %v539 = vrot.slane %v538, 4
      %v540 = vrot.slane %v472, 6
      %v541 = vsel %vm509, %v539, %v540
      %v542 = vrot.slane %v540, 4
      %v543 = vrot.slane %v473, 6
      %v544 = vsel %vm509, %v542, %v543
      %v545 = vrot.slane %v474, 6
      %v546 = vrot.slane %v545, 4
      %v547 = vrot.slane %v475, 6
      %v548 = vsel %vm509, %v546, %v547
      %v549 = vrot.slane %v547, 4
      %v550 = vrot.slane %v476, 6
      %v551 = vsel %vm509, %v549, %v550
      %v552 = vrot.slane %v477, 6
      %v553 = vrot.slane %v552, 4
      %v554 = vrot.slane %v478, 6
      %v555 = vsel %vm509, %v553, %v554
      %v556 = vrot.slane %v554, 4
      %v557 = vrot.slane %v479, 6
      %v558 = vsel %vm509, %v556, %v557
      %v559 = vrot.slane %v480, 6
      %v560 = vrot.slane %v559, 4
      %v561 = vrot.slane %v481, 6
      %v562 = vsel %vm509, %v560, %v561
      %v563 = vrot.slane %v561, 4
      %v564 = vrot.slane %v482, 6
      %v565 = vsel %vm509, %v563, %v564
      %v566 = vunpack.c.l.b16 %v513
      %v567 = vunpack.c.l.b16 %v516
      %v568 = vunpack.c.l.b16 %v520
      %v569 = vunpack.c.l.b16 %v523
      %v570 = vunpack.c.l.b16 %v527
      %v571 = vunpack.c.l.b16 %v530
      %v572 = vunpack.c.l.b16 %v534
      %v573 = vunpack.c.l.b16 %v537
      %v574 = vunpack.c.l.b16 %v541
      %v575 = vunpack.c.l.b16 %v544
      %v576 = vunpack.c.l.b16 %v548
      %v577 = vunpack.c.l.b16 %v551
      %v578 = vunpack.c.l.b16 %v555
      %v579 = vunpack.c.l.b16 %v558
      %v580 = vunpack.c.l.b16 %v562
      %v581 = vunpack.c.l.b16 %v565
      %v582 = vpack.c.b16 %v567, %v566
      %v583 = vpack.c.b16 %v569, %v568
      %v584 = vpack.c.b16 %v571, %v570
      %v585 = vpack.c.b16 %v573, %v572
      %v586 = vpack.c.b16 %v575, %v574
      %v587 = vpack.c.b16 %v577, %v576
      %v588 = vpack.c.b16 %v579, %v578
      %v589 = vpack.c.b16 %v581, %v580
      %590 = vrot.lane.b32.xlu0 %v582, 8
      %v591 = vpop.permute.xlu0 %590
      %592 = vrot.lane.b32.xlu0 %v583, 8
      %v593 = vpop.permute.xlu0 %592
      %594 = vrot.lane.b32.xlu0 %v584, 8
      %v595 = vpop.permute.xlu0 %594
      %596 = vrot.lane.b32.xlu0 %v585, 8
      %v597 = vpop.permute.xlu0 %596
      %598 = vrot.lane.b32.xlu0 %v586, 8
      %v599 = vpop.permute.xlu0 %598
      %600 = vrot.lane.b32.xlu0 %v587, 8
      %v601 = vpop.permute.xlu0 %600
      %602 = vrot.lane.b32.xlu0 %v588, 8
      %v603 = vpop.permute.xlu0 %602
      %604 = vrot.lane.b32.xlu0 %v589, 8
      %v605 = vpop.permute.xlu0 %604
      %vm614 = vcmask 97344
      %615 = vst.msk [vmem:[#allocation2] sm:$0xff] %vm614, %v591
      %616 = vst.msk [vmem:[#allocation2 + $0x8] sm:$0xff] %vm614, %v593
      %617 = vst.msk [vmem:[#allocation2 + $0x10] sm:$0xff] %vm614, %v595
      %618 = vst.msk [vmem:[#allocation2 + $0x18] sm:$0xff] %vm614, %v597
      %619 = vst.msk [vmem:[#allocation2 + $0x20] sm:$0xff] %vm614, %v599
      %620 = vst.msk [vmem:[#allocation2 + $0x28] sm:$0xff] %vm614, %v601
      %621 = vst.msk [vmem:[#allocation2 + $0x30] sm:$0xff] %vm614, %v603
      %622 = vst.msk [vmem:[#allocation2 + $0x38] sm:$0xff] %vm614, %v605
      %s623 = sadd.s32 %s218, 2
      %s624 = smul.u32 %s623, 3
      %s625 = smul.addr %s624, 4
      %s626 = scalar_lea.vmem %s197, %s625
      %v627 = vld [vmem:[%s626] sm:$0xf]
      %v628 = vld [vmem:[%s626 + $0x4] sm:$0xf]
      %v629 = vld [vmem:[%s626 + $0xc] sm:$0xf]
      %v630 = vld [vmem:[%s626 + $0x10] sm:$0xf]
      %v631 = vld [vmem:[%s626 + $0x18] sm:$0xf]
      %v632 = vld [vmem:[%s626 + $0x1c] sm:$0xf]
      %v633 = vld [vmem:[%s626 + $0x24] sm:$0xf]
      %v634 = vld [vmem:[%s626 + $0x28] sm:$0xf]
      %v635 = vld [vmem:[%s626 + $0x30] sm:$0xf]
      %v636 = vld [vmem:[%s626 + $0x34] sm:$0xf]
      %v637 = vld [vmem:[%s626 + $0x3c] sm:$0xf]
      %v638 = vld [vmem:[%s626 + $0x40] sm:$0xf]
      %v639 = vld [vmem:[%s626 + $0x48] sm:$0xf]
      %v640 = vld [vmem:[%s626 + $0x4c] sm:$0xf]
      %v641 = vld [vmem:[%s626 + $0x54] sm:$0xf]
      %v642 = vld [vmem:[%s626 + $0x58] sm:$0xf]
      %v659 = vunpack.c.l.b16 %v627
      %v660 = vunpack.c.l.b16 %v628
      %v661 = vunpack.c.l.b16 %v629
      %v662 = vunpack.c.l.b16 %v630
      %v663 = vunpack.c.l.b16 %v631
      %v664 = vunpack.c.l.b16 %v632
      %v665 = vunpack.c.l.b16 %v633
      %v666 = vunpack.c.l.b16 %v634
      %v667 = vunpack.c.l.b16 %v635
      %v668 = vunpack.c.l.b16 %v636
      %v669 = vunpack.c.l.b16 %v637
      %v670 = vunpack.c.l.b16 %v638
      %v671 = vunpack.c.l.b16 %v639
      %v672 = vunpack.c.l.b16 %v640
      %v673 = vunpack.c.l.b16 %v641
      %v674 = vunpack.c.l.b16 %v642
      %v675 = vpack.c.b16 %v660, %v659
      %v676 = vpack.c.b16 %v662, %v661
      %v677 = vpack.c.b16 %v664, %v663
      %v678 = vpack.c.b16 %v666, %v665
      %v679 = vpack.c.b16 %v668, %v667
      %v680 = vpack.c.b16 %v670, %v669
      %v681 = vpack.c.b16 %v672, %v671
      %v682 = vpack.c.b16 %v674, %v673
      %683 = vrot.lane.b32.xlu0 %v675, 12
      %v684 = vpop.permute.xlu0 %683
      %685 = vrot.lane.b32.xlu0 %v676, 12
      %v686 = vpop.permute.xlu0 %685
      %687 = vrot.lane.b32.xlu0 %v677, 12
      %v688 = vpop.permute.xlu0 %687
      %689 = vrot.lane.b32.xlu0 %v678, 12
      %v690 = vpop.permute.xlu0 %689
      %691 = vrot.lane.b32.xlu0 %v679, 12
      %v692 = vpop.permute.xlu0 %691
      %693 = vrot.lane.b32.xlu0 %v680, 12
      %v694 = vpop.permute.xlu0 %693
      %695 = vrot.lane.b32.xlu0 %v681, 12
      %v696 = vpop.permute.xlu0 %695
      %697 = vrot.lane.b32.xlu0 %v682, 12
      %v698 = vpop.permute.xlu0 %697
      %vm707 = vcmask 130144
      %708 = vst.msk [vmem:[#allocation2] sm:$0xff] %vm707, %v684
      %709 = vst.msk [vmem:[#allocation2 + $0x8] sm:$0xff] %vm707, %v686
      %710 = vst.msk [vmem:[#allocation2 + $0x10] sm:$0xff] %vm707, %v688
      %711 = vst.msk [vmem:[#allocation2 + $0x18] sm:$0xff] %vm707, %v690
      %712 = vst.msk [vmem:[#allocation2 + $0x20] sm:$0xff] %vm707, %v692
      %713 = vst.msk [vmem:[#allocation2 + $0x28] sm:$0xff] %vm707, %v694
      %714 = vst.msk [vmem:[#allocation2 + $0x30] sm:$0xff] %vm707, %v696
      %715 = vst.msk [vmem:[#allocation2 + $0x38] sm:$0xff] %vm707, %v698
      %v716 = vld [vmem:[%s626] sm:$0xe]
      %v717 = vld [vmem:[%s626 + $0x4] sm:$0xf]
      %v718 = vld [vmem:[%s626 + $0x8] sm:$0x1]
      %v719 = vld [vmem:[%s626 + $0xc] sm:$0xe]
      %v720 = vld [vmem:[%s626 + $0x10] sm:$0xf]
      %v721 = vld [vmem:[%s626 + $0x14] sm:$0x1]
      %v722 = vld [vmem:[%s626 + $0x18] sm:$0xe]
      %v723 = vld [vmem:[%s626 + $0x1c] sm:$0xf]
      %v724 = vld [vmem:[%s626 + $0x20] sm:$0x1]
      %v725 = vld [vmem:[%s626 + $0x24] sm:$0xe]
      %v726 = vld [vmem:[%s626 + $0x28] sm:$0xf]
      %v727 = vld [vmem:[%s626 + $0x2c] sm:$0x1]
      %v728 = vld [vmem:[%s626 + $0x30] sm:$0xe]
      %v729 = vld [vmem:[%s626 + $0x34] sm:$0xf]
      %v730 = vld [vmem:[%s626 + $0x38] sm:$0x1]
      %v731 = vld [vmem:[%s626 + $0x3c] sm:$0xe]
      %v732 = vld [vmem:[%s626 + $0x40] sm:$0xf]
      %v733 = vld [vmem:[%s626 + $0x44] sm:$0x1]
      %v734 = vld [vmem:[%s626 + $0x48] sm:$0xe]
      %v735 = vld [vmem:[%s626 + $0x4c] sm:$0xf]
      %v736 = vld [vmem:[%s626 + $0x50] sm:$0x1]
      %v737 = vld [vmem:[%s626 + $0x54] sm:$0xe]
      %v738 = vld [vmem:[%s626 + $0x58] sm:$0xf]
      %v739 = vld [vmem:[%s626 + $0x5c] sm:$0x1]
      %v764 = vrot.slane %v716, 5
      %v765 = vrot.slane %v764, 4
      %v766 = vrot.slane %v717, 5
      %v767 = vsel %vm345, %v765, %v766
      %v768 = vrot.slane %v766, 4
      %v769 = vrot.slane %v718, 5
      %v770 = vsel %vm345, %v768, %v769
      %v771 = vrot.slane %v719, 5
      %v772 = vrot.slane %v771, 4
      %v773 = vrot.slane %v720, 5
      %v774 = vsel %vm345, %v772, %v773
      %v775 = vrot.slane %v773, 4
      %v776 = vrot.slane %v721, 5
      %v777 = vsel %vm345, %v775, %v776
      %v778 = vrot.slane %v722, 5
      %v779 = vrot.slane %v778, 4
      %v780 = vrot.slane %v723, 5
      %v781 = vsel %vm345, %v779, %v780
      %v782 = vrot.slane %v780, 4
      %v783 = vrot.slane %v724, 5
      %v784 = vsel %vm345, %v782, %v783
      %v785 = vrot.slane %v725, 5
      %v786 = vrot.slane %v785, 4
      %v787 = vrot.slane %v726, 5
      %v788 = vsel %vm345, %v786, %v787
      %v789 = vrot.slane %v787, 4
      %v790 = vrot.slane %v727, 5
      %v791 = vsel %vm345, %v789, %v790
      %v792 = vrot.slane %v728, 5
      %v793 = vrot.slane %v792, 4
      %v794 = vrot.slane %v729, 5
      %v795 = vsel %vm345, %v793, %v794
      %v796 = vrot.slane %v794, 4
      %v797 = vrot.slane %v730, 5
      %v798 = vsel %vm345, %v796, %v797
      %v799 = vrot.slane %v731, 5
      %v800 = vrot.slane %v799, 4
      %v801 = vrot.slane %v732, 5
      %v802 = vsel %vm345, %v800, %v801
      %v803 = vrot.slane %v801, 4
      %v804 = vrot.slane %v733, 5
      %v805 = vsel %vm345, %v803, %v804
      %v806 = vrot.slane %v734, 5
      %v807 = vrot.slane %v806, 4
      %v808 = vrot.slane %v735, 5
      %v809 = vsel %vm345, %v807, %v808
      %v810 = vrot.slane %v808, 4
      %v811 = vrot.slane %v736, 5
      %v812 = vsel %vm345, %v810, %v811
      %v813 = vrot.slane %v737, 5
      %v814 = vrot.slane %v813, 4
      %v815 = vrot.slane %v738, 5
      %v816 = vsel %vm345, %v814, %v815
      %v817 = vrot.slane %v815, 4
      %v818 = vrot.slane %v739, 5
      %v819 = vsel %vm345, %v817, %v818
      %v820 = vunpack.c.l.b16 %v767
      %v821 = vunpack.c.l.b16 %v770
      %v822 = vunpack.c.l.b16 %v774
      %v823 = vunpack.c.l.b16 %v777
      %v824 = vunpack.c.l.b16 %v781
      %v825 = vunpack.c.l.b16 %v784
      %v826 = vunpack.c.l.b16 %v788
      %v827 = vunpack.c.l.b16 %v791
      %v828 = vunpack.c.l.b16 %v795
      %v829 = vunpack.c.l.b16 %v798
      %v830 = vunpack.c.l.b16 %v802
      %v831 = vunpack.c.l.b16 %v805
      %v832 = vunpack.c.l.b16 %v809
      %v833 = vunpack.c.l.b16 %v812
      %v834 = vunpack.c.l.b16 %v816
      %v835 = vunpack.c.l.b16 %v819
      %v836 = vpack.c.b16 %v821, %v820
      %v837 = vpack.c.b16 %v823, %v822
      %v838 = vpack.c.b16 %v825, %v824
      %v839 = vpack.c.b16 %v827, %v826
      %v840 = vpack.c.b16 %v829, %v828
      %v841 = vpack.c.b16 %v831, %v830
      %v842 = vpack.c.b16 %v833, %v832
      %v843 = vpack.c.b16 %v835, %v834
      %844 = vrot.lane.b32.xlu0 %v836, 16
      %v845 = vpop.permute.xlu0 %844
      %846 = vrot.lane.b32.xlu0 %v837, 16
      %v847 = vpop.permute.xlu0 %846
      %848 = vrot.lane.b32.xlu0 %v838, 16
      %v849 = vpop.permute.xlu0 %848
      %850 = vrot.lane.b32.xlu0 %v839, 16
      %v851 = vpop.permute.xlu0 %850
      %852 = vrot.lane.b32.xlu0 %v840, 16
      %v853 = vpop.permute.xlu0 %852
      %854 = vrot.lane.b32.xlu0 %v841, 16
      %v855 = vpop.permute.xlu0 %854
      %856 = vrot.lane.b32.xlu0 %v842, 16
      %v857 = vpop.permute.xlu0 %856
      %858 = vrot.lane.b32.xlu0 %v843, 16
      %v859 = vpop.permute.xlu0 %858
      %vm868 = vcmask 162944
      %869 = vst.msk [vmem:[#allocation2] sm:$0xff] %vm868, %v845
      %870 = vst.msk [vmem:[#allocation2 + $0x8] sm:$0xff] %vm868, %v847
      %871 = vst.msk [vmem:[#allocation2 + $0x10] sm:$0xff] %vm868, %v849
      %872 = vst.msk [vmem:[#allocation2 + $0x18] sm:$0xff] %vm868, %v851
      %873 = vst.msk [vmem:[#allocation2 + $0x20] sm:$0xff] %vm868, %v853
      %874 = vst.msk [vmem:[#allocation2 + $0x28] sm:$0xff] %vm868, %v855
      %875 = vst.msk [vmem:[#allocation2 + $0x30] sm:$0xff] %vm868, %v857
      %876 = vst.msk [vmem:[#allocation2 + $0x38] sm:$0xff] %vm868, %v859
      %v877 = vld [vmem:[%s626] sm:$0xc]
      %v878 = vld [vmem:[%s626 + $0x4] sm:$0xf]
      %v879 = vld [vmem:[%s626 + $0x8] sm:$0x3]
      %v880 = vld [vmem:[%s626 + $0xc] sm:$0xc]
      %v881 = vld [vmem:[%s626 + $0x10] sm:$0xf]
      %v882 = vld [vmem:[%s626 + $0x14] sm:$0x3]
      %v883 = vld [vmem:[%s626 + $0x18] sm:$0xc]
      %v884 = vld [vmem:[%s626 + $0x1c] sm:$0xf]
      %v885 = vld [vmem:[%s626 + $0x20] sm:$0x3]
      %v886 = vld [vmem:[%s626 + $0x24] sm:$0xc]
      %v887 = vld [vmem:[%s626 + $0x28] sm:$0xf]
      %v888 = vld [vmem:[%s626 + $0x2c] sm:$0x3]
      %v889 = vld [vmem:[%s626 + $0x30] sm:$0xc]
      %v890 = vld [vmem:[%s626 + $0x34] sm:$0xf]
      %v891 = vld [vmem:[%s626 + $0x38] sm:$0x3]
      %v892 = vld [vmem:[%s626 + $0x3c] sm:$0xc]
      %v893 = vld [vmem:[%s626 + $0x40] sm:$0xf]
      %v894 = vld [vmem:[%s626 + $0x44] sm:$0x3]
      %v895 = vld [vmem:[%s626 + $0x48] sm:$0xc]
      %v896 = vld [vmem:[%s626 + $0x4c] sm:$0xf]
      %v897 = vld [vmem:[%s626 + $0x50] sm:$0x3]
      %v898 = vld [vmem:[%s626 + $0x54] sm:$0xc]
      %v899 = vld [vmem:[%s626 + $0x58] sm:$0xf]
      %v900 = vld [vmem:[%s626 + $0x5c] sm:$0x3]
      %v925 = vrot.slane %v877, 6
      %v926 = vrot.slane %v925, 4
      %v927 = vrot.slane %v878, 6
      %v928 = vsel %vm509, %v926, %v927
      %v929 = vrot.slane %v927, 4
      %v930 = vrot.slane %v879, 6
      %v931 = vsel %vm509, %v929, %v930
      %v932 = vrot.slane %v880, 6
      %v933 = vrot.slane %v932, 4
      %v934 = vrot.slane %v881, 6
      %v935 = vsel %vm509, %v933, %v934
      %v936 = vrot.slane %v934, 4
      %v937 = vrot.slane %v882, 6
      %v938 = vsel %vm509, %v936, %v937
      %v939 = vrot.slane %v883, 6
      %v940 = vrot.slane %v939, 4
      %v941 = vrot.slane %v884, 6
      %v942 = vsel %vm509, %v940, %v941
      %v943 = vrot.slane %v941, 4
      %v944 = vrot.slane %v885, 6
      %v945 = vsel %vm509, %v943, %v944
      %v946 = vrot.slane %v886, 6
      %v947 = vrot.slane %v946, 4
      %v948 = vrot.slane %v887, 6
      %v949 = vsel %vm509, %v947, %v948
      %v950 = vrot.slane %v948, 4
      %v951 = vrot.slane %v888, 6
      %v952 = vsel %vm509, %v950, %v951
      %v953 = vrot.slane %v889, 6
      %v954 = vrot.slane %v953, 4
      %v955 = vrot.slane %v890, 6
      %v956 = vsel %vm509, %v954, %v955
      %v957 = vrot.slane %v955, 4
      %v958 = vrot.slane %v891, 6
      %v959 = vsel %vm509, %v957, %v958
      %v960 = vrot.slane %v892, 6
      %v961 = vrot.slane %v960, 4
      %v962 = vrot.slane %v893, 6
      %v963 = vsel %vm509, %v961, %v962
      %v964 = vrot.slane %v962, 4
      %v965 = vrot.slane %v894, 6
      %v966 = vsel %vm509, %v964, %v965
      %v967 = vrot.slane %v895, 6
      %v968 = vrot.slane %v967, 4
      %v969 = vrot.slane %v896, 6
      %v970 = vsel %vm509, %v968, %v969
      %v971 = vrot.slane %v969, 4
      %v972 = vrot.slane %v897, 6
      %v973 = vsel %vm509, %v971, %v972
      %v974 = vrot.slane %v898, 6
      %v975 = vrot.slane %v974, 4
      %v976 = vrot.slane %v899, 6
      %v977 = vsel %vm509, %v975, %v976
      %v978 = vrot.slane %v976, 4
      %v979 = vrot.slane %v900, 6
      %v980 = vsel %vm509, %v978, %v979
      %v981 = vunpack.c.l.b16 %v928
      %v982 = vunpack.c.l.b16 %v931
      %v983 = vunpack.c.l.b16 %v935
      %v984 = vunpack.c.l.b16 %v938
      %v985 = vunpack.c.l.b16 %v942
      %v986 = vunpack.c.l.b16 %v945
      %v987 = vunpack.c.l.b16 %v949
      %v988 = vunpack.c.l.b16 %v952
      %v989 = vunpack.c.l.b16 %v956
      %v990 = vunpack.c.l.b16 %v959
      %v991 = vunpack.c.l.b16 %v963
      %v992 = vunpack.c.l.b16 %v966
      %v993 = vunpack.c.l.b16 %v970
      %v994 = vunpack.c.l.b16 %v973
      %v995 = vunpack.c.l.b16 %v977
      %v996 = vunpack.c.l.b16 %v980
      %v997 = vpack.c.b16 %v982, %v981
      %v998 = vpack.c.b16 %v984, %v983
      %v999 = vpack.c.b16 %v986, %v985
      %v1000 = vpack.c.b16 %v988, %v987
      %v1001 = vpack.c.b16 %v990, %v989
      %v1002 = vpack.c.b16 %v992, %v991
      %v1003 = vpack.c.b16 %v994, %v993
      %v1004 = vpack.c.b16 %v996, %v995
      %1005 = vrot.lane.b32.xlu0 %v997, 20
      %v1006 = vpop.permute.xlu0 %1005
      %1007 = vrot.lane.b32.xlu0 %v998, 20
      %v1008 = vpop.permute.xlu0 %1007
      %1009 = vrot.lane.b32.xlu0 %v999, 20
      %v1010 = vpop.permute.xlu0 %1009
      %1011 = vrot.lane.b32.xlu0 %v1000, 20
      %v1012 = vpop.permute.xlu0 %1011
      %1013 = vrot.lane.b32.xlu0 %v1001, 20
      %v1014 = vpop.permute.xlu0 %1013
      %1015 = vrot.lane.b32.xlu0 %v1002, 20
      %v1016 = vpop.permute.xlu0 %1015
      %1017 = vrot.lane.b32.xlu0 %v1003, 20
      %v1018 = vpop.permute.xlu0 %1017
      %1019 = vrot.lane.b32.xlu0 %v1004, 20
      %v1020 = vpop.permute.xlu0 %1019
      %vm1029 = vcmask 195744
      %1030 = vst.msk [vmem:[#allocation2] sm:$0xff] %vm1029, %v1006
      %1031 = vst.msk [vmem:[#allocation2 + $0x8] sm:$0xff] %vm1029, %v1008
      %1032 = vst.msk [vmem:[#allocation2 + $0x10] sm:$0xff] %vm1029, %v1010
      %1033 = vst.msk [vmem:[#allocation2 + $0x18] sm:$0xff] %vm1029, %v1012
      %1034 = vst.msk [vmem:[#allocation2 + $0x20] sm:$0xff] %vm1029, %v1014
      %1035 = vst.msk [vmem:[#allocation2 + $0x28] sm:$0xff] %vm1029, %v1016
      %1036 = vst.msk [vmem:[#allocation2 + $0x30] sm:$0xff] %vm1029, %v1018
      %1037 = vst.msk [vmem:[#allocation2 + $0x38] sm:$0xff] %vm1029, %v1020
      %s1038 = sadd.s32 %s218, 4
      %s1039 = smul.u32 %s1038, 3
      %s1040 = smul.addr %s1039, 4
      %s1041 = scalar_lea.vmem %s197, %s1040
      %v1042 = vld [vmem:[%s1041] sm:$0xf]
      %v1043 = vld [vmem:[%s1041 + $0x4] sm:$0xf]
      %v1044 = vld [vmem:[%s1041 + $0xc] sm:$0xf]
      %v1045 = vld [vmem:[%s1041 + $0x10] sm:$0xf]
      %v1046 = vld [vmem:[%s1041 + $0x18] sm:$0xf]
      %v1047 = vld [vmem:[%s1041 + $0x1c] sm:$0xf]
      %v1048 = vld [vmem:[%s1041 + $0x24] sm:$0xf]
      %v1049 = vld [vmem:[%s1041 + $0x28] sm:$0xf]
      %v1050 = vld [vmem:[%s1041 + $0x30] sm:$0xf]
      %v1051 = vld [vmem:[%s1041 + $0x34] sm:$0xf]
      %v1052 = vld [vmem:[%s1041 + $0x3c] sm:$0xf]
      %v1053 = vld [vmem:[%s1041 + $0x40] sm:$0xf]
      %v1054 = vld [vmem:[%s1041 + $0x48] sm:$0xf]
      %v1055 = vld [vmem:[%s1041 + $0x4c] sm:$0xf]
      %v1056 = vld [vmem:[%s1041 + $0x54] sm:$0xf]
      %v1057 = vld [vmem:[%s1041 + $0x58] sm:$0xf]
      %v1074 = vunpack.c.l.b16 %v1042
      %v1075 = vunpack.c.l.b16 %v1043
      %v1076 = vunpack.c.l.b16 %v1044
      %v1077 = vunpack.c.l.b16 %v1045
      %v1078 = vunpack.c.l.b16 %v1046
      %v1079 = vunpack.c.l.b16 %v1047
      %v1080 = vunpack.c.l.b16 %v1048
      %v1081 = vunpack.c.l.b16 %v1049
      %v1082 = vunpack.c.l.b16 %v1050
      %v1083 = vunpack.c.l.b16 %v1051
      %v1084 = vunpack.c.l.b16 %v1052
      %v1085 = vunpack.c.l.b16 %v1053
      %v1086 = vunpack.c.l.b16 %v1054
      %v1087 = vunpack.c.l.b16 %v1055
      %v1088 = vunpack.c.l.b16 %v1056
      %v1089 = vunpack.c.l.b16 %v1057
      %v1090 = vpack.c.b16 %v1075, %v1074
      %v1091 = vpack.c.b16 %v1077, %v1076
      %v1092 = vpack.c.b16 %v1079, %v1078
      %v1093 = vpack.c.b16 %v1081, %v1080
      %v1094 = vpack.c.b16 %v1083, %v1082
      %v1095 = vpack.c.b16 %v1085, %v1084
      %v1096 = vpack.c.b16 %v1087, %v1086
      %v1097 = vpack.c.b16 %v1089, %v1088
      %1098 = vrot.lane.b32.xlu0 %v1090, 24
      %v1099 = vpop.permute.xlu0 %1098
      %1100 = vrot.lane.b32.xlu0 %v1091, 24
      %v1101 = vpop.permute.xlu0 %1100
      %1102 = vrot.lane.b32.xlu0 %v1092, 24
      %v1103 = vpop.permute.xlu0 %1102
      %1104 = vrot.lane.b32.xlu0 %v1093, 24
      %v1105 = vpop.permute.xlu0 %1104
      %1106 = vrot.lane.b32.xlu0 %v1094, 24
      %v1107 = vpop.permute.xlu0 %1106
      %1108 = vrot.lane.b32.xlu0 %v1095, 24
      %v1109 = vpop.permute.xlu0 %1108
      %1110 = vrot.lane.b32.xlu0 %v1096, 24
      %v1111 = vpop.permute.xlu0 %1110
      %1112 = vrot.lane.b32.xlu0 %v1097, 24
      %v1113 = vpop.permute.xlu0 %1112
      %vm1122 = vcmask 228544
      %1123 = vst.msk [vmem:[#allocation2] sm:$0xff] %vm1122, %v1099
      %1124 = vst.msk [vmem:[#allocation2 + $0x8] sm:$0xff] %vm1122, %v1101
      %1125 = vst.msk [vmem:[#allocation2 + $0x10] sm:$0xff] %vm1122, %v1103
      %1126 = vst.msk [vmem:[#allocation2 + $0x18] sm:$0xff] %vm1122, %v1105
      %1127 = vst.msk [vmem:[#allocation2 + $0x20] sm:$0xff] %vm1122, %v1107
      %1128 = vst.msk [vmem:[#allocation2 + $0x28] sm:$0xff] %vm1122, %v1109
      %1129 = vst.msk [vmem:[#allocation2 + $0x30] sm:$0xff] %vm1122, %v1111
      %1130 = vst.msk [vmem:[#allocation2 + $0x38] sm:$0xff] %vm1122, %v1113
      %v1131 = vld [vmem:[%s1041] sm:$0xe]
      %v1132 = vld [vmem:[%s1041 + $0x4] sm:$0xf]
      %v1133 = vld [vmem:[%s1041 + $0x8] sm:$0x1]
      %v1134 = vld [vmem:[%s1041 + $0xc] sm:$0xe]
      %v1135 = vld [vmem:[%s1041 + $0x10] sm:$0xf]
      %v1136 = vld [vmem:[%s1041 + $0x14] sm:$0x1]
      %v1137 = vld [vmem:[%s1041 + $0x18] sm:$0xe]
      %v1138 = vld [vmem:[%s1041 + $0x1c] sm:$0xf]
      %v1139 = vld [vmem:[%s1041 + $0x20] sm:$0x1]
      %v1140 = vld [vmem:[%s1041 + $0x24] sm:$0xe]
      %v1141 = vld [vmem:[%s1041 + $0x28] sm:$0xf]
      %v1142 = vld [vmem:[%s1041 + $0x2c] sm:$0x1]
      %v1143 = vld [vmem:[%s1041 + $0x30] sm:$0xe]
      %v1144 = vld [vmem:[%s1041 + $0x34] sm:$0xf]
      %v1145 = vld [vmem:[%s1041 + $0x38] sm:$0x1]
      %v1146 = vld [vmem:[%s1041 + $0x3c] sm:$0xe]
      %v1147 = vld [vmem:[%s1041 + $0x40] sm:$0xf]
      %v1148 = vld [vmem:[%s1041 + $0x44] sm:$0x1]
      %v1149 = vld [vmem:[%s1041 + $0x48] sm:$0xe]
      %v1150 = vld [vmem:[%s1041 + $0x4c] sm:$0xf]
      %v1151 = vld [vmem:[%s1041 + $0x50] sm:$0x1]
      %v1152 = vld [vmem:[%s1041 + $0x54] sm:$0xe]
      %v1153 = vld [vmem:[%s1041 + $0x58] sm:$0xf]
      %v1154 = vld [vmem:[%s1041 + $0x5c] sm:$0x1]
      %v1179 = vrot.slane %v1131, 5
      %v1180 = vrot.slane %v1179, 4
      %v1181 = vrot.slane %v1132, 5
      %v1182 = vsel %vm345, %v1180, %v1181
      %v1183 = vrot.slane %v1181, 4
      %v1184 = vrot.slane %v1133, 5
      %v1185 = vsel %vm345, %v1183, %v1184
      %v1186 = vrot.slane %v1134, 5
      %v1187 = vrot.slane %v1186, 4
      %v1188 = vrot.slane %v1135, 5
      %v1189 = vsel %vm345, %v1187, %v1188
      %v1190 = vrot.slane %v1188, 4
      %v1191 = vrot.slane %v1136, 5
      %v1192 = vsel %vm345, %v1190, %v1191
      %v1193 = vrot.slane %v1137, 5
      %v1194 = vrot.slane %v1193, 4
      %v1195 = vrot.slane %v1138, 5
      %v1196 = vsel %vm345, %v1194, %v1195
      %v1197 = vrot.slane %v1195, 4
      %v1198 = vrot.slane %v1139, 5
      %v1199 = vsel %vm345, %v1197, %v1198
      %v1200 = vrot.slane %v1140, 5
      %v1201 = vrot.slane %v1200, 4
      %v1202 = vrot.slane %v1141, 5
      %v1203 = vsel %vm345, %v1201, %v1202
      %v1204 = vrot.slane %v1202, 4
      %v1205 = vrot.slane %v1142, 5
      %v1206 = vsel %vm345, %v1204, %v1205
      %v1207 = vrot.slane %v1143, 5
      %v1208 = vrot.slane %v1207, 4
      %v1209 = vrot.slane %v1144, 5
      %v1210 = vsel %vm345, %v1208, %v1209
      %v1211 = vrot.slane %v1209, 4
      %v1212 = vrot.slane %v1145, 5
      %v1213 = vsel %vm345, %v1211, %v1212
      %v1214 = vrot.slane %v1146, 5
      %v1215 = vrot.slane %v1214, 4
      %v1216 = vrot.slane %v1147, 5
      %v1217 = vsel %vm345, %v1215, %v1216
      %v1218 = vrot.slane %v1216, 4
      %v1219 = vrot.slane %v1148, 5
      %v1220 = vsel %vm345, %v1218, %v1219
      %v1221 = vrot.slane %v1149, 5
      %v1222 = vrot.slane %v1221, 4
      %v1223 = vrot.slane %v1150, 5
      %v1224 = vsel %vm345, %v1222, %v1223
      %v1225 = vrot.slane %v1223, 4
      %v1226 = vrot.slane %v1151, 5
      %v1227 = vsel %vm345, %v1225, %v1226
      %v1228 = vrot.slane %v1152, 5
      %v1229 = vrot.slane %v1228, 4
      %v1230 = vrot.slane %v1153, 5
      %v1231 = vsel %vm345, %v1229, %v1230
      %v1232 = vrot.slane %v1230, 4
      %v1233 = vrot.slane %v1154, 5
      %v1234 = vsel %vm345, %v1232, %v1233
      %v1235 = vunpack.c.l.b16 %v1182
      %v1236 = vunpack.c.l.b16 %v1185
      %v1237 = vunpack.c.l.b16 %v1189
      %v1238 = vunpack.c.l.b16 %v1192
      %v1239 = vunpack.c.l.b16 %v1196
      %v1240 = vunpack.c.l.b16 %v1199
      %v1241 = vunpack.c.l.b16 %v1203
      %v1242 = vunpack.c.l.b16 %v1206
      %v1243 = vunpack.c.l.b16 %v1210
      %v1244 = vunpack.c.l.b16 %v1213
      %v1245 = vunpack.c.l.b16 %v1217
      %v1246 = vunpack.c.l.b16 %v1220
      %v1247 = vunpack.c.l.b16 %v1224
      %v1248 = vunpack.c.l.b16 %v1227
      %v1249 = vunpack.c.l.b16 %v1231
      %v1250 = vunpack.c.l.b16 %v1234
      %v1251 = vpack.c.b16 %v1236, %v1235
      %v1252 = vpack.c.b16 %v1238, %v1237
      %v1253 = vpack.c.b16 %v1240, %v1239
      %v1254 = vpack.c.b16 %v1242, %v1241
      %v1255 = vpack.c.b16 %v1244, %v1243
      %v1256 = vpack.c.b16 %v1246, %v1245
      %v1257 = vpack.c.b16 %v1248, %v1247
      %v1258 = vpack.c.b16 %v1250, %v1249
      %1259 = vrot.lane.b32.xlu0 %v1251, 28
      %v1260 = vpop.permute.xlu0 %1259
      %1261 = vrot.lane.b32.xlu0 %v1252, 28
      %v1262 = vpop.permute.xlu0 %1261
      %1263 = vrot.lane.b32.xlu0 %v1253, 28
      %v1264 = vpop.permute.xlu0 %1263
      %1265 = vrot.lane.b32.xlu0 %v1254, 28
      %v1266 = vpop.permute.xlu0 %1265
      %1267 = vrot.lane.b32.xlu0 %v1255, 28
      %v1268 = vpop.permute.xlu0 %1267
      %1269 = vrot.lane.b32.xlu0 %v1256, 28
      %v1270 = vpop.permute.xlu0 %1269
      %1271 = vrot.lane.b32.xlu0 %v1257, 28
      %v1272 = vpop.permute.xlu0 %1271
      %1273 = vrot.lane.b32.xlu0 %v1258, 28
      %v1274 = vpop.permute.xlu0 %1273
      %vm1283 = vcmask 261344
      %1284 = vst.msk [vmem:[#allocation2] sm:$0xff] %vm1283, %v1260
      %1285 = vst.msk [vmem:[#allocation2 + $0x8] sm:$0xff] %vm1283, %v1262
      %1286 = vst.msk [vmem:[#allocation2 + $0x10] sm:$0xff] %vm1283, %v1264
      %1287 = vst.msk [vmem:[#allocation2 + $0x18] sm:$0xff] %vm1283, %v1266
      %1288 = vst.msk [vmem:[#allocation2 + $0x20] sm:$0xff] %vm1283, %v1268
      %1289 = vst.msk [vmem:[#allocation2 + $0x28] sm:$0xff] %vm1283, %v1270
      %1290 = vst.msk [vmem:[#allocation2 + $0x30] sm:$0xff] %vm1283, %v1272
      %1291 = vst.msk [vmem:[#allocation2 + $0x38] sm:$0xff] %vm1283, %v1274
      %v1292 = vld [vmem:[%s1041] sm:$0xc]
      %v1293 = vld [vmem:[%s1041 + $0x4] sm:$0xf]
      %v1294 = vld [vmem:[%s1041 + $0x8] sm:$0x3]
      %v1295 = vld [vmem:[%s1041 + $0xc] sm:$0xc]
      %v1296 = vld [vmem:[%s1041 + $0x10] sm:$0xf]
      %v1297 = vld [vmem:[%s1041 + $0x14] sm:$0x3]
      %v1298 = vld [vmem:[%s1041 + $0x18] sm:$0xc]
      %v1299 = vld [vmem:[%s1041 + $0x1c] sm:$0xf]
      %v1300 = vld [vmem:[%s1041 + $0x20] sm:$0x3]
      %v1301 = vld [vmem:[%s1041 + $0x24] sm:$0xc]
      %v1302 = vld [vmem:[%s1041 + $0x28] sm:$0xf]
      %v1303 = vld [vmem:[%s1041 + $0x2c] sm:$0x3]
      %v1304 = vld [vmem:[%s1041 + $0x30] sm:$0xc]
      %v1305 = vld [vmem:[%s1041 + $0x34] sm:$0xf]
      %v1306 = vld [vmem:[%s1041 + $0x38] sm:$0x3]
      %v1307 = vld [vmem:[%s1041 + $0x3c] sm:$0xc]
      %v1308 = vld [vmem:[%s1041 + $0x40] sm:$0xf]
      %v1309 = vld [vmem:[%s1041 + $0x44] sm:$0x3]
      %v1310 = vld [vmem:[%s1041 + $0x48] sm:$0xc]
      %v1311 = vld [vmem:[%s1041 + $0x4c] sm:$0xf]
      %v1312 = vld [vmem:[%s1041 + $0x50] sm:$0x3]
      %v1313 = vld [vmem:[%s1041 + $0x54] sm:$0xc]
      %v1314 = vld [vmem:[%s1041 + $0x58] sm:$0xf]
      %v1315 = vld [vmem:[%s1041 + $0x5c] sm:$0x3]
      %v1340 = vrot.slane %v1292, 6
      %v1341 = vrot.slane %v1340, 4
      %v1342 = vrot.slane %v1293, 6
      %v1343 = vsel %vm509, %v1341, %v1342
      %v1344 = vrot.slane %v1342, 4
      %v1345 = vrot.slane %v1294, 6
      %v1346 = vsel %vm509, %v1344, %v1345
      %v1347 = vrot.slane %v1295, 6
      %v1348 = vrot.slane %v1347, 4
      %v1349 = vrot.slane %v1296, 6
      %v1350 = vsel %vm509, %v1348, %v1349
      %v1351 = vrot.slane %v1349, 4
      %v1352 = vrot.slane %v1297, 6
      %v1353 = vsel %vm509, %v1351, %v1352
      %v1354 = vrot.slane %v1298, 6
      %v1355 = vrot.slane %v1354, 4
      %v1356 = vrot.slane %v1299, 6
      %v1357 = vsel %vm509, %v1355, %v1356
      %v1358 = vrot.slane %v1356, 4
      %v1359 = vrot.slane %v1300, 6
      %v1360 = vsel %vm509, %v1358, %v1359
      %v1361 = vrot.slane %v1301, 6
      %v1362 = vrot.slane %v1361, 4
      %v1363 = vrot.slane %v1302, 6
      %v1364 = vsel %vm509, %v1362, %v1363
      %v1365 = vrot.slane %v1363, 4
      %v1366 = vrot.slane %v1303, 6
      %v1367 = vsel %vm509, %v1365, %v1366
      %v1368 = vrot.slane %v1304, 6
      %v1369 = vrot.slane %v1368, 4
      %v1370 = vrot.slane %v1305, 6
      %v1371 = vsel %vm509, %v1369, %v1370
      %v1372 = vrot.slane %v1370, 4
      %v1373 = vrot.slane %v1306, 6
      %v1374 = vsel %vm509, %v1372, %v1373
      %v1375 = vrot.slane %v1307, 6
      %v1376 = vrot.slane %v1375, 4
      %v1377 = vrot.slane %v1308, 6
      %v1378 = vsel %vm509, %v1376, %v1377
      %v1379 = vrot.slane %v1377, 4
      %v1380 = vrot.slane %v1309, 6
      %v1381 = vsel %vm509, %v1379, %v1380
      %v1382 = vrot.slane %v1310, 6
      %v1383 = vrot.slane %v1382, 4
      %v1384 = vrot.slane %v1311, 6
      %v1385 = vsel %vm509, %v1383, %v1384
      %v1386 = vrot.slane %v1384, 4
      %v1387 = vrot.slane %v1312, 6
      %v1388 = vsel %vm509, %v1386, %v1387
      %v1389 = vrot.slane %v1313, 6
      %v1390 = vrot.slane %v1389, 4
      %v1391 = vrot.slane %v1314, 6
      %v1392 = vsel %vm509, %v1390, %v1391
      %v1393 = vrot.slane %v1391, 4
      %v1394 = vrot.slane %v1315, 6
      %v1395 = vsel %vm509, %v1393, %v1394
      %v1396 = vunpack.c.l.b16 %v1343
      %v1397 = vunpack.c.l.b16 %v1346
      %v1398 = vunpack.c.l.b16 %v1350
      %v1399 = vunpack.c.l.b16 %v1353
      %v1400 = vunpack.c.l.b16 %v1357
      %v1401 = vunpack.c.l.b16 %v1360
      %v1402 = vunpack.c.l.b16 %v1364
      %v1403 = vunpack.c.l.b16 %v1367
      %v1404 = vunpack.c.l.b16 %v1371
      %v1405 = vunpack.c.l.b16 %v1374
      %v1406 = vunpack.c.l.b16 %v1378
      %v1407 = vunpack.c.l.b16 %v1381
      %v1408 = vunpack.c.l.b16 %v1385
      %v1409 = vunpack.c.l.b16 %v1388
      %v1410 = vunpack.c.l.b16 %v1392
      %v1411 = vunpack.c.l.b16 %v1395
      %v1412 = vpack.c.b16 %v1397, %v1396
      %v1413 = vpack.c.b16 %v1399, %v1398
      %v1414 = vpack.c.b16 %v1401, %v1400
      %v1415 = vpack.c.b16 %v1403, %v1402
      %v1416 = vpack.c.b16 %v1405, %v1404
      %v1417 = vpack.c.b16 %v1407, %v1406
      %v1418 = vpack.c.b16 %v1409, %v1408
      %v1419 = vpack.c.b16 %v1411, %v1410
      %1420 = vrot.lane.b32.xlu0 %v1412, 32
      %v1421 = vpop.permute.xlu0 %1420
      %1422 = vrot.lane.b32.xlu0 %v1413, 32
      %v1423 = vpop.permute.xlu0 %1422
      %1424 = vrot.lane.b32.xlu0 %v1414, 32
      %v1425 = vpop.permute.xlu0 %1424
      %1426 = vrot.lane.b32.xlu0 %v1415, 32
      %v1427 = vpop.permute.xlu0 %1426
      %1428 = vrot.lane.b32.xlu0 %v1416, 32
      %v1429 = vpop.permute.xlu0 %1428
      %1430 = vrot.lane.b32.xlu0 %v1417, 32
      %v1431 = vpop.permute.xlu0 %1430
      %1432 = vrot.lane.b32.xlu0 %v1418, 32
      %v1433 = vpop.permute.xlu0 %1432
      %1434 = vrot.lane.b32.xlu0 %v1419, 32
      %v1435 = vpop.permute.xlu0 %1434
      %vm1444 = vcmask 294144
      %1445 = vst.msk [vmem:[#allocation2] sm:$0xff] %vm1444, %v1421
      %1446 = vst.msk [vmem:[#allocation2 + $0x8] sm:$0xff] %vm1444, %v1423
      %1447 = vst.msk [vmem:[#allocation2 + $0x10] sm:$0xff] %vm1444, %v1425
      %1448 = vst.msk [vmem:[#allocation2 + $0x18] sm:$0xff] %vm1444, %v1427
      %1449 = vst.msk [vmem:[#allocation2 + $0x20] sm:$0xff] %vm1444, %v1429
      %1450 = vst.msk [vmem:[#allocation2 + $0x28] sm:$0xff] %vm1444, %v1431
      %1451 = vst.msk [vmem:[#allocation2 + $0x30] sm:$0xff] %vm1444, %v1433
      %1452 = vst.msk [vmem:[#allocation2 + $0x38] sm:$0xff] %vm1444, %v1435
      %v1453 = vld [vmem:[%s1] sm:$0x3]
      %v1454 = vld [vmem:[%s1 + $0x2] sm:$0x3]
      %v1455 = vld [vmem:[%s1 + $0x4] sm:$0x3]
      %v1456 = vld [vmem:[%s1 + $0x6] sm:$0x3]
      %v1457 = vld [vmem:[%s1 + $0x8] sm:$0x3]
      %v1458 = vld [vmem:[%s1 + $0xa] sm:$0x3]
      %v1459 = vld [vmem:[%s1 + $0xc] sm:$0x3]
      %v1460 = vld [vmem:[%s1 + $0xe] sm:$0x3]
      %v1461 = vld [vmem:[%s1 + $0x10] sm:$0x3]
      %v1462 = vld [vmem:[#allocation2] sm:$0xff]
      %v1463 = vld [vmem:[#allocation2 + $0x8] sm:$0xff]
      %v1464 = vld [vmem:[#allocation2 + $0x10] sm:$0xff]
      %v1465 = vld [vmem:[#allocation2 + $0x18] sm:$0xff]
      %v1466 = vld [vmem:[#allocation2 + $0x20] sm:$0xff]
      %v1467 = vld [vmem:[#allocation2 + $0x28] sm:$0xff]
      %v1468 = vld [vmem:[#allocation2 + $0x30] sm:$0xff]
      %v1469 = vld [vmem:[#allocation2 + $0x38] sm:$0xff]
      %v1479 = vcombine.low %v1453, %v1454
      %v1480 = vcombine.low %v1455, %v1456
      %v1482 = vunpack.c.l.s4 1983009808
      %v1483 = vunpack.c.0.s8 %v1482
      %v1484 = vlaneseq
      %v1485 = vshrl.u32 %v1484, 7
      %v1486 = vsub.s32 %v1483, %v1485
      %v1487 = vrot.slane %v1479, %v1486
      %v1489 = vunpack.c.l.s4 1983009808
      %v1490 = vunpack.c.0.s8 %v1489
      %v1491 = vlaneseq
      %v1492 = vshrl.u32 %v1491, 7
      %v1493 = vsub.s32 %v1490, %v1492
      %v1494 = vrot.slane %v1480, %v1493
      %v1495 = vcombine.low %v1487, %v1494
      %v1496 = vcombine.low %v1457, %v1458
      %v1497 = vcombine.low %v1459, %v1460
      %v1499 = vunpack.c.l.s4 1983009808
      %v1500 = vunpack.c.0.s8 %v1499
      %v1501 = vlaneseq
      %v1502 = vshrl.u32 %v1501, 7
      %v1503 = vsub.s32 %v1500, %v1502
      %v1504 = vrot.slane %v1496, %v1503
      %v1506 = vunpack.c.l.s4 1983009808
      %v1507 = vunpack.c.0.s8 %v1506
      %v1508 = vlaneseq
      %v1509 = vshrl.u32 %v1508, 7
      %v1510 = vsub.s32 %v1507, %v1509
      %v1511 = vrot.slane %v1497, %v1510
      %v1512 = vcombine.low %v1504, %v1511
      %v1514 = vunpack.c.l.s4 1983009808
      %v1515 = vunpack.c.0.s8 %v1514
      %v1516 = vlaneseq
      %v1517 = vshrl.u32 %v1516, 7
      %v1518 = vsub.s32 %v1515, %v1517
      %v1519 = vrot.slane %v1461, %v1518
      %vm1522 = vcmask 293888
      %v1524 = vsel %vm1522, %v1462, 0
      %v1527 = vsel %vm1522, %v1463, 0
      %v1530 = vsel %vm1522, %v1464, 0
      %v1533 = vsel %vm1522, %v1465, 0
      %v1536 = vsel %vm1522, %v1466, 0
      %v1539 = vsel %vm1522, %v1467, 0
      %v1542 = vsel %vm1522, %v1468, 0
      %v1545 = vsel %vm1522, %v1469, 0
      %vm1547 = vcmask 1041408
      %v1549 = vsel %vm1547, %v1519, 0
      %1551 = vmatprep.subr.bf16.mxu0 0
      %1552 = vmatpush1.bf16.msra.mxu0 %v1495
      %1553 = vmatprep.subr.bf16.mxu0 0
      %1554 = vmatpush1.bf16.msra.mxu0 %v1512
      %1555 = vmatprep.subr.bf16.mxu0 0
      %1556 = vmatpush1.bf16.msra.mxu0 %v1549
      %1557 = vmatprep.subr.bf16.mxu0 0
      %1558 = vmatpush1.bf16.msra.mxu0 0
      %1559 = vmatprep.subr.bf16.mxu0 0
      %1560 = vmatpush1.bf16.msra.mxu0 0
      %1561 = vmatprep.subr.bf16.mxu0 0
      %1562 = vmatpush1.bf16.msra.mxu0 0
      %1563 = vmatprep.subr.bf16.mxu0 0
      %1564 = vmatpush1.bf16.msra.mxu0 0
      %1565 = vmatprep.subr.bf16.mxu0 0
      %1566 = vmatpush1.bf16.msra.mxu0 0
      %1567 = vmatprep.subr.bf16.mxu0 0
      %1568 = vmatpush1.bf16.msra.mxu0 0
      %1569 = vmatprep.subr.bf16.mxu0 0
      %1570 = vmatpush1.bf16.msra.mxu0 0
      %1571 = vmatprep.subr.bf16.mxu0 0
      %1572 = vmatpush1.bf16.msra.mxu0 0
      %1573 = vmatprep.subr.bf16.mxu0 0
      %1574 = vmatpush1.bf16.msra.mxu0 0
      %1575 = vmatprep.subr.bf16.mxu0 0
      %1576 = vmatpush1.bf16.msra.mxu0 0
      %1577 = vmatprep.subr.bf16.mxu0 0
      %1578 = vmatpush1.bf16.msra.mxu0 0
      %1579 = vmatprep.subr.bf16.mxu0 0
      %1580 = vmatpush1.bf16.msra.mxu0 0
      %1581 = vmatprep.subr.bf16.mxu0 0
      %1582 = vmatpush1.bf16.msra.mxu0 0
      %1583 = vmatprep.mubr.bf16.mxu0 0
      %1584 = vmatmul.mubr.bf16.gmra.mrb[0].mxu0 %v1524
      %v1585 = vpop.f32.mrb[0].mxu0
      %v1586 = vadd.f32 0.0, %v1585
      %v1587 = vpop.f32.mrb[0].mxu0
      %v1588 = vpop.f32.mrb[0].mxu0
      %v1589 = vadd.f32 0.0, %v1588
      %v1590 = vpop.f32.mrb[0].mxu0
      %1591 = vmatprep.mubr.bf16.mxu0 0
      %1592 = vmatmul.mubr.bf16.gmra.mrb[0].mxu0 %v1527
      %v1593 = vpop.f32.mrb[0].mxu0
      %v1594 = vadd.f32 0.0, %v1593
      %v1595 = vpop.f32.mrb[0].mxu0
      %v1596 = vpop.f32.mrb[0].mxu0
      %v1597 = vadd.f32 0.0, %v1596
      %v1598 = vpop.f32.mrb[0].mxu0
      %1599 = vmatprep.mubr.bf16.mxu0 0
      %1600 = vmatmul.mubr.bf16.gmra.mrb[0].mxu0 %v1530
      %v1601 = vpop.f32.mrb[0].mxu0
      %v1602 = vadd.f32 0.0, %v1601
      %v1603 = vpop.f32.mrb[0].mxu0
      %v1604 = vpop.f32.mrb[0].mxu0
      %v1605 = vadd.f32 0.0, %v1604
      %v1606 = vpop.f32.mrb[0].mxu0
      %1607 = vmatprep.mubr.bf16.mxu0 0
      %1608 = vmatmul.mubr.bf16.gmra.mrb[0].mxu0 %v1533
      %v1609 = vpop.f32.mrb[0].mxu0
      %v1610 = vadd.f32 0.0, %v1609
      %v1611 = vpop.f32.mrb[0].mxu0
      %v1612 = vpop.f32.mrb[0].mxu0
      %v1613 = vadd.f32 0.0, %v1612
      %v1614 = vpop.f32.mrb[0].mxu0
      %1615 = vmatprep.mubr.bf16.mxu0 0
      %1616 = vmatmul.mubr.bf16.gmra.mrb[0].mxu0 %v1536
      %v1617 = vpop.f32.mrb[0].mxu0
      %v1618 = vadd.f32 0.0, %v1617
      %v1619 = vpop.f32.mrb[0].mxu0
      %v1620 = vpop.f32.mrb[0].mxu0
      %v1621 = vadd.f32 0.0, %v1620
      %v1622 = vpop.f32.mrb[0].mxu0
      %1623 = vmatprep.mubr.bf16.mxu0 0
      %1624 = vmatmul.mubr.bf16.gmra.mrb[0].mxu0 %v1539
      %v1625 = vpop.f32.mrb[0].mxu0
      %v1626 = vadd.f32 0.0, %v1625
      %v1627 = vpop.f32.mrb[0].mxu0
      %v1628 = vpop.f32.mrb[0].mxu0
      %v1629 = vadd.f32 0.0, %v1628
      %v1630 = vpop.f32.mrb[0].mxu0
      %1631 = vmatprep.mubr.bf16.mxu0 0
      %1632 = vmatmul.mubr.bf16.gmra.mrb[0].mxu0 %v1542
      %v1633 = vpop.f32.mrb[0].mxu0
      %v1634 = vadd.f32 0.0, %v1633
      %v1635 = vpop.f32.mrb[0].mxu0
      %v1636 = vpop.f32.mrb[0].mxu0
      %v1637 = vadd.f32 0.0, %v1636
      %v1638 = vpop.f32.mrb[0].mxu0
      %1639 = vmatprep.mubr.bf16.mxu0 0
      %1640 = vmatmul.mubr.bf16.gmra.mrb[0].mxu0 %v1545
      %v1641 = vpop.f32.mrb[0].mxu0
      %v1642 = vadd.f32 0.0, %v1641
      %v1643 = vpop.f32.mrb[0].mxu0
      %v1644 = vpop.f32.mrb[0].mxu0
      %v1645 = vadd.f32 0.0, %v1644
      %v1646 = vpop.f32.mrb[0].mxu0
      %1647 = vdwg.mxu0
      %1648 = vst [vmem:[%s207] sm:$0xff] %v1586
      %1649 = vst [vmem:[%s207 + $0x8] sm:$0xff] %v1589
      %1650 = vst [vmem:[%s207 + $0x10] sm:$0xff] %v1594
      %1651 = vst [vmem:[%s207 + $0x18] sm:$0xff] %v1597
      %1652 = vst [vmem:[%s207 + $0x20] sm:$0xff] %v1602
      %1653 = vst [vmem:[%s207 + $0x28] sm:$0xff] %v1605
      %1654 = vst [vmem:[%s207 + $0x30] sm:$0xff] %v1610
      %1655 = vst [vmem:[%s207 + $0x38] sm:$0xff] %v1613
      %1656 = vst [vmem:[%s207 + $0x40] sm:$0xff] %v1618
      %1657 = vst [vmem:[%s207 + $0x48] sm:$0xff] %v1621
      %1658 = vst [vmem:[%s207 + $0x50] sm:$0xff] %v1626
      %1659 = vst [vmem:[%s207 + $0x58] sm:$0xff] %v1629
      %1660 = vst [vmem:[%s207 + $0x60] sm:$0xff] %v1634
      %1661 = vst [vmem:[%s207 + $0x68] sm:$0xff] %v1637
      %1662 = vst [vmem:[%s207 + $0x70] sm:$0xff] %v1642
      %1663 = vst [vmem:[%s207 + $0x78] sm:$0xff] %v1645
      %v1664 = vadd.f32 %v1586, %v1589
      %v1665 = vadd.f32 %v1664, %v1594
      %v1666 = vadd.f32 %v1665, %v1597
      %v1667 = vadd.f32 %v1666, %v1602
      %v1668 = vadd.f32 %v1667, %v1605
      %v1669 = vadd.f32 %v1668, %v1610
      %v1670 = vadd.f32 %v1669, %v1613
      %v1671 = vadd.f32 %v1670, %v1618
      %v1672 = vadd.f32 %v1671, %v1621
      %v1673 = vadd.f32 %v1672, %v1626
      %v1674 = vadd.f32 %v1673, %v1629
      %v1675 = vadd.f32 %v1674, %v1634
      %v1676 = vadd.f32 %v1675, %v1637
      %v1677 = vadd.f32 %v1676, %v1642
      %v1678 = vadd.f32 %v1677, %v1645
      %v1679 = vrot.slane %v1678, 4
      %v1680 = vadd.f32 %v1678, %v1679
      %v1681 = vrot.slane %v1680, 2
      %v1682 = vadd.f32 %v1680, %v1681
      %v1683 = vrot.slane %v1682, 1
      %v1684 = vadd.f32 %v1682, %v1683
      %v1685 = vmul.f32 %v1586, %v1586
      %v1686 = vmul.f32 %v1589, %v1589
      %v1687 = vmul.f32 %v1594, %v1594
      %v1688 = vmul.f32 %v1597, %v1597
      %v1689 = vmul.f32 %v1602, %v1602
      %v1690 = vmul.f32 %v1605, %v1605
      %v1691 = vmul.f32 %v1610, %v1610
      %v1692 = vmul.f32 %v1613, %v1613
      %v1693 = vmul.f32 %v1618, %v1618
      %v1694 = vmul.f32 %v1621, %v1621
      %v1695 = vmul.f32 %v1626, %v1626
      %v1696 = vmul.f32 %v1629, %v1629
      %v1697 = vmul.f32 %v1634, %v1634
      %v1698 = vmul.f32 %v1637, %v1637
      %v1699 = vmul.f32 %v1642, %v1642
      %v1700 = vmul.f32 %v1645, %v1645
      %v1701 = vadd.f32 %v1685, %v1686
      %v1702 = vadd.f32 %v1701, %v1687
      %v1703 = vadd.f32 %v1702, %v1688
      %v1704 = vadd.f32 %v1703, %v1689
      %v1705 = vadd.f32 %v1704, %v1690
      %v1706 = vadd.f32 %v1705, %v1691
      %v1707 = vadd.f32 %v1706, %v1692
      %v1708 = vadd.f32 %v1707, %v1693
      %v1709 = vadd.f32 %v1708, %v1694
      %v1710 = vadd.f32 %v1709, %v1695
      %v1711 = vadd.f32 %v1710, %v1696
      %v1712 = vadd.f32 %v1711, %v1697
      %v1713 = vadd.f32 %v1712, %v1698
      %v1714 = vadd.f32 %v1713, %v1699
      %v1715 = vadd.f32 %v1714, %v1700
      %v1716 = vrot.slane %v1715, 4
      %v1717 = vadd.f32 %v1715, %v1716
      %v1718 = vrot.slane %v1717, 2
      %v1719 = vadd.f32 %v1717, %v1718
      %v1720 = vrot.slane %v1719, 1
      %v1721 = vadd.f32 %v1719, %v1720
      %v1722 = vlaneseq
      %v1723 = vshrl.u32 %v1722, 7
      %vm1724 = vcmp.eq.s32.totalorder %v1723, 0
      %vm1725 = vcmp.eq.s32.totalorder %v1723, 1
      %v1726 = vsel %vm1725, %v1721, 0.0
      %v1727 = vsel %vm1724, %v1684, %v1726
      %1728 = vst [vmem:[%s216] sm:$0xff] %v1727
      %s1729 = smul.u32 8, %s20
      %p1730 = scmp.lt.s32.totalorder %s19, 1
      %s1731 = scalar_select %p1730, %s19, 1
      %p1732 = scmp.lt.s32.totalorder %s1729, 15
      %s1733 = scalar_select %p1732, %s1729, 15
      %s1734 = smul.addr %s1733, 2
      %s1735 = smul.addr %s1731, 32
      %s1736 = sadd.s32 %s1734, %s1735
      %s1737 = smul.addr %s1736, 8
      %s1738 = scalar_lea.vmem %s2, %s1737
      %p1739 = scmp.lt.s32.totalorder %s19, 1
      %s1740 = scalar_select %p1739, %s19, 1
      %p1741 = scmp.lt.s32.totalorder %s20, 1
      %s1742 = scalar_select %p1741, %s20, 1
      %s1743 = smul.addr %s1740, 2
      %s1744 = sadd.s32 %s1742, %s1743
      %s1745 = smul.addr %s1744, 8
      %s1746 = scalar_lea.vmem %s3, %s1745
      // Predicated region
      $region29: #{aspp_module_forward.2} parent=27 // pred_check
        %p1747 = pneg %p94
      $region30: #{aspp_module_forward.2} parent=27 // pred_check_branch
        %1749 = sbr.rel (%p1747) target = $region32
      $region31: #{aspp_module_forward.2} parent=27 // pred_region
        %s1750 = smul.u32 8, %s20
      $region32: #{aspp_module_forward.2} parent=27 // pred_fallthru
        _
      // Predicated region
      $region33: #{aspp_module_forward.2} parent=27 // pred_check
        %p1751 = pneg %p122
      $region34: #{aspp_module_forward.2} parent=27 // pred_check_branch
        %1753 = sbr.rel (%p1751) target = $region36
      $region35: #{aspp_module_forward.2} parent=27 // pred_region
        _
      $region36: #{aspp_module_forward.2} parent=27 // pred_fallthru
        _
    $region28: #{aspp_module_forward.2} parent=5 // pred_fallthru
      _
    %p1754 = scmp.le.s32.totalorder 2, %s10
    // Predicated region
    $region37: #{aspp_module_forward.2} parent=5 // pred_check
      %p1755 = pneg %p1754
    $region38: #{aspp_module_forward.2} parent=5 // pred_check_branch
      %1757 = sbr.rel (%p1755) target = $region40
    $region39: #{aspp_module_forward.2} parent=5 // pred_region
      %s1758 = ssub.s32 %s10, 2
      // Predicated region
      $region41: #{aspp_module_forward.2} parent=39 // pred_check
        %p1759 = pneg %p100
      $region42: #{aspp_module_forward.2} parent=39 // pred_check_branch
        %1761 = sbr.rel (%p1759) target = $region44
      $region43: #{aspp_module_forward.2} parent=39 // pred_region
        %s1762 = smul.u32 8, %s22
        %p1763 = scmp.lt.s32.totalorder %s21, 1
        %s1764 = scalar_select %p1763, %s21, 1
        %p1765 = scmp.lt.s32.totalorder %s1762, 15
        %s1766 = scalar_select %p1765, %s1762, 15
        %s1767 = smul.addr %s1766, 2
        %s1768 = smul.addr %s1764, 32
        %s1769 = sadd.s32 %s1767, %s1768
        %s1770 = smul.addr %s1769, 8
        %s1771 = scalar_lea.vmem %s2, %s1770
      $region44: #{aspp_module_forward.2} parent=39 // pred_fallthru
        _
      // Predicated region
      $region45: #{aspp_module_forward.2} parent=39 // pred_check
        %p1772 = pneg %p128
      $region46: #{aspp_module_forward.2} parent=39 // pred_check_branch
        %1774 = sbr.rel (%p1772) target = $region48
      $region47: #{aspp_module_forward.2} parent=39 // pred_region
        %p1775 = scmp.lt.s32.totalorder %s21, 1
        %s1776 = scalar_select %p1775, %s21, 1
        %p1777 = scmp.lt.s32.totalorder %s22, 1
        %s1778 = scalar_select %p1777, %s22, 1
        %s1779 = smul.addr %s1776, 2
        %s1780 = sadd.s32 %s1778, %s1779
        %s1781 = smul.addr %s1780, 8
        %s1782 = scalar_lea.vmem %s3, %s1781
      $region48: #{aspp_module_forward.2} parent=39 // pred_fallthru
        _
    $region40: #{aspp_module_forward.2} parent=5 // pred_fallthru
      _
  $region6: #{aspp_module_forward.2} parent=0 // loop_footer
    %s14 = sadd.s32 1, %s10
  $region7: #{aspp_module_forward.2} parent=0 // loop_footer_branch
    %9 = sbr.rel target = $region3
  $region8: #{aspp_module_forward.2} parent=0 // loop_exit
    _

</llo_original>
